<compile_context>
chip_gen: v7x
topology: tpu7x:2x2x1
jax: 0.10.0
libtpu: 0.0.40
codegen_flags: <defaults>
</compile_context>

<pallas_src>
import functools
import math

import jax
import jax.numpy as jnp
from jax import lax
from jax.experimental import pallas as pl
from jax.experimental.pallas import tpu as pltpu

# ---- module constants (deterministic, from pdeFix.__init__) -----------------
DT = 0.04 / 128.0
DDRAG = math.exp(-3.0 * DT)
SPRI_Y = 10000.0
QUAD_S = 1.0 / 128.0
DASH_D = 30000.0
G_Y = -9.8
EPS = 1e-9

SCALE = DDRAG * DT                      # final `ff *= ddrag*dt`, folded in
SPRI_Y_S = SPRI_Y * SCALE
DASH_S = QUAD_S * DASH_D * SCALE
G_Y_S = G_Y * SCALE

# roll offsets (i = row shift, j = col shift), same order as the torch module
ROLLS = [(-2, 0), (0, 2), (2, 0), (0, -2), (-1, 0), (-1, 1),
         (0, 1), (1, 1), (1, 0), (1, -1), (0, -1), (-1, -1)]


# ---------------------------------------------------------------------------
# roll helpers
# ---------------------------------------------------------------------------
@functools.lru_cache(maxsize=None)
def _probe_roll_mode():
    """Probe pltpu.roll on the exact shapes/axes the kernel uses.

    Returns: 1 -> np.roll semantics, 2 -> reversed rotation, 0 -> unavailable
    (fall back to slice+concat circular roll).
    """
    try:
        def probe(x_ref, o_ref):
            t = pltpu.roll(x_ref[...], 1, axis=1)      # sublane rotate
            o_ref[...] = pltpu.roll(t, 1, axis=2)      # lane rotate

        lane = jnp.arange(128, dtype=jnp.float32)
        sub = jnp.arange(8, dtype=jnp.float32)
        x = jnp.broadcast_to(
            lane[None, None, :] + 1000.0 * sub[None, :, None], (3, 8, 128))
        y = jax.block_until_ready(
            pl.pallas_call(
                probe,
                out_shape=jax.ShapeDtypeStruct((3, 8, 128), jnp.float32))(x))
        v = float(y[0, 0, 0])
        if v == 7127.0:      # x[0, 7, 127] -> np.roll convention
            return 1
        if v == 1001.0:      # x[0, 1, 1]   -> reversed convention
            return 2
        return 0
    except Exception:        # lowering not supported on this backend
        return 0


def _circ_roll(a, amt, axis, roll_mode):
    """np.roll(a, amt, axis) inside the kernel (XLU rotate when available)."""
    n = a.shape[axis]
    amt = amt % n
    if amt == 0:
        return a
    if roll_mode == 0:                       # slice+concat fallback
        lo = lax.slice_in_dim(a, n - amt, n, axis=axis)
        hi = lax.slice_in_dim(a, 0, n - amt, axis=axis)
        return jnp.concatenate([lo, hi], axis=axis)
    hw_amt = amt if roll_mode == 1 else (n - amt) % n
    return pltpu.roll(a, hw_amt, axis=axis)


# ---------------------------------------------------------------------------
# kernel
# ---------------------------------------------------------------------------
def _pde_fix_kernel(h_ref, colm_ref, out_ref, *, w, roll_mode):
    """One block: h_ref (6, H, TBW), colm_ref (1, TBW), out_ref (3, H, TBW).

    TBW = (samples per block) * W; colm_ref holds the within-sample column
    index (0..W-1) of every lane, used for the per-sample edge fix-ups.
    """
    hv = h_ref[...]
    x = hv[0:3]                              # positions  (3, H, TBW)
    v = hv[3:6]                              # velocities (3, H, TBW)
    _, hh, tbw = x.shape

    # hoisted index arrays / boundary masks (computed once per block)
    row = lax.broadcasted_iota(jnp.int32, (3, hh, tbw), 1)
    colm = jnp.broadcast_to(colm_ref[...][None], (3, hh, tbw))
    w_keep = {j: (colm >= w - j) if j > 0 else (colm < -j)
              for j in (-2, -1, 1, 2)}

    def shift_h(a, s):
        # torch cat-style edge-replicating shift along H (sublane) axis
        if s == 0:
            return a
        keep = (row >= hh - s) if s > 0 else (row < -s)
        return jnp.where(keep, a, _circ_roll(a, -s, 1, roll_mode))

    def shift_w(a, s):
        # per-sample edge-replicating shift along the merged lane axis
        if s == 0:
            return a
        return jnp.where(w_keep[s], a, _circ_roll(a, -s, 2, roll_mode))

    # hoist & CSE the H-axis shifts (i = -1 / +1 are each reused by 3 rolls)
    xh = {0: x}
    vh = {0: v}
    for i in (-2, -1, 1, 2):
        xh[i] = shift_h(x, i)
        vh[i] = shift_h(v, i)

    ff = jnp.zeros_like(x)
    for (i, j) in ROLLS:
        dx = x - shift_w(xh[i], j)
        dv = v - shift_w(vh[i], j)
        rinv = lax.rsqrt((dx * dx).sum(axis=0, keepdims=True) + EPS)
        xnorm = dx * rinv
        dot = (dv * xnorm).sum(axis=0, keepdims=True)
        coef = (SPRI_Y / math.sqrt(i * i + j * j) / QUAD_S) * SCALE
        # single fused accumulator update per roll (DDRAG*DT pre-folded)
        ff = ff + (xnorm * (SPRI_Y_S - DASH_S * dot) - coef * dx)

    # gravity acts on the y channel only; DDRAG*DT already folded in
    out_ref[0, :, :] = ff[0].astype(out_ref.dtype)
    out_ref[1, :, :] = (ff[1] + G_Y_S).astype(out_ref.dtype)
    out_ref[2, :, :] = ff[2].astype(out_ref.dtype)


# ---------------------------------------------------------------------------
# wrapper
# ---------------------------------------------------------------------------
def _pick_block_samples(B, H, W, itemsize=4, budget_bytes=4 << 20):
    """Samples per grid step: lane-dense (tb*W % 128 == 0) when possible,
    block bytes bounded, and >=2 grid steps preferred (v7x has 2 TCs)."""
    divs = [t for t in range(1, B + 1) if B % t == 0]
    legal = [t for t in divs if (t * W) % 128 == 0 or t == B]
    fit = [t for t in legal if 6 * H * t * W * itemsize <= budget_bytes]
    if not fit:
        fit = [min(legal)]
    dense = [t for t in fit if (t * W) % 128 == 0]
    pool = dense if dense else fit
    pool2 = [t for t in pool if B // t >= 2] or pool
    return max(pool2)


def pde_fix(h, *, block_samples=None):
    """h: (B, 6, H, W) float32 -> (B, 3, H, W) float32."""
    B, C, H, W = h.shape
    assert C == 6, "expected 6 input channels (x:0..2, v:3..5)"

    roll_mode = _probe_roll_mode()
    tb = (block_samples if block_samples is not None
          else _pick_block_samples(B, H, W))
    assert B % tb == 0
    tbw = tb * W

    # lane-dense re-layout: (B, 6, H, W) -> (6, H, B*W)
    hm = jnp.transpose(h, (1, 2, 0, 3)).reshape(6, H, B * W)
    # within-sample column index of every merged lane (for edge fix-ups)
    colm = jnp.tile(jnp.arange(W, dtype=jnp.int32), B).reshape(1, B * W)

    kernel = functools.partial(_pde_fix_kernel, w=W, roll_mode=roll_mode)
    out = pl.pallas_call(
        kernel,
        out_shape=jax.ShapeDtypeStruct((3, H, B * W), h.dtype),
        grid_spec=pltpu.PrefetchScalarGridSpec(
            num_scalar_prefetch=0,
            grid=(B // tb,),
            in_specs=[
                pl.BlockSpec((6, H, tbw), lambda b: (0, 0, b)),
                pl.BlockSpec((1, tbw), lambda b: (0, b)),
            ],
            out_specs=pl.BlockSpec((3, H, tbw), lambda b: (0, 0, b)),
        ),
        compiler_params=pltpu.CompilerParams(
            dimension_semantics=("parallel",),
            vmem_limit_bytes=32 * 1024 * 1024,
        ),
    )(hm, colm)

    return jnp.transpose(out.reshape(3, H, B, W), (2, 0, 1, 3))


# ---------------------------------------------------------------------------
# pure-JAX reference (mirrors the torch forward, float32)
# ---------------------------------------------------------------------------
def _shift(a, axis, s):
    """torch cat-based 'shift with edge copy'."""
    if s == 0:
        return a
    n = a.shape[axis]
    if s > 0:
        head = lax.slice_in_dim(a, s, n, axis=axis)
        tail = lax.slice_in_dim(a, n - s, n, axis=axis)
    else:
        k = -s
        head = lax.slice_in_dim(a, 0, k, axis=axis)
        tail = lax.slice_in_dim(a, 0, n - k, axis=axis)
    return jnp.concatenate([head, tail], axis=axis)


def pde_fix_ref(h):
    x = h[:, 0:3]
    v = h[:, 3:6]
    ff = jnp.zeros_like(x)
    for (i, j) in ROLLS:
        sx = _shift(_shift(x, 2, i), 3, j)
        sv = _shift(_shift(v, 2, i), 3, j)
        dx = x - sx
        dv = v - sv
        coef = SPRI_Y / math.sqrt(i * i + j * j) / QUAD_S
        ff = ff - coef * dx
        normx = jnp.sqrt((dx * dx).sum(axis=1, keepdims=True) + EPS)
        xnorm = dx / normx
        ff = ff + SPRI_Y * xnorm
        ff = ff - QUAD_S * DASH_D * (dv * xnorm).sum(axis=1,
                                                     keepdims=True) * xnorm
    g = jnp.array([0.0, G_Y, 0.0], dtype=h.dtype).reshape(1, 3, 1, 1)
    return (ff + g) * (DDRAG * DT)


if __name__ == "__main__":
    key = jax.random.PRNGKey(0)
    B, H, W = 16, 16, 16
    h = jax.random.normal(key, (B, 6, H, W), dtype=jnp.float32)

    out = jax.block_until_ready(pde_fix(h))
    ref = jax.block_until_ready(pde_fix_ref(h))

    assert out.shape == (B, 3, H, W)
    if not jnp.allclose(out, ref, rtol=1e-3, atol=1e-2):
        max_err = float(jnp.max(jnp.abs(out - ref)))
        raise AssertionError(
            f"Pallas kernel output does not match reference "
            f"(max abs err {max_err})")
    print("KERNEL_OK")
</pallas_src>

<mosaic_0001>
module attributes {stable_mosaic.version = 11 : i64} {
  func.func @probe(%arg0: memref<3x8x128xf32, #tpu.memory_space<vmem>>, %arg1: memref<3x8x128xf32, #tpu.memory_space<vmem>>) attributes {dimension_semantics = [], scalar_prefetch = 0 : i64, scratch_operands = 0 : i64, tpu.core_type = #tpu.core_type<tc>} {
    %c0 = arith.constant 0 : index
    %c0_0 = arith.constant 0 : index
    %c0_1 = arith.constant 0 : index
    %0 = vector.load %arg0[%c0, %c0_0, %c0_1] : memref<3x8x128xf32, #tpu.memory_space<vmem>>, vector<3x8x128xf32>
    %c1_i32 = arith.constant 1 : i32
    %1 = tpu.dynamic_rotate %0 by %c1_i32 dim 1 : vector<3x8x128xf32>, i32 -> vector<3x8x128xf32>
    %c1_i32_2 = arith.constant 1 : i32
    %2 = tpu.dynamic_rotate %1 by %c1_i32_2 dim 2 : vector<3x8x128xf32>, i32 -> vector<3x8x128xf32>
    %c0_3 = arith.constant 0 : index
    %c0_4 = arith.constant 0 : index
    %c0_5 = arith.constant 0 : index
    %3 = vector.load %arg1[%c0_3, %c0_4, %c0_5] : memref<3x8x128xf32, #tpu.memory_space<vmem>>, vector<3x8x128xf32>
    tpu.vector_store %arg1[%c0_3, %c0_4, %c0_5], %2 {strides = array<i32>} : memref<3x8x128xf32, #tpu.memory_space<vmem>>, vector<3x8x128xf32>,
    return
  }
}

module attributes {stable_mosaic.version = 11 : i64} {
  func.func @_pde_fix_kernel(%arg0: i32, %arg1: memref<6x16x128xf32, #tpu.memory_space<vmem>>, %arg2: memref<1x128xi32, #tpu.memory_space<vmem>>, %arg3: memref<3x16x128xf32, #tpu.memory_space<vmem>>) attributes {dimension_semantics = [#tpu.dimension_semantics<parallel>], iteration_bounds = array<i64: 2>, scalar_prefetch = 0 : i64, scratch_operands = 0 : i64, tpu.core_type = #tpu.core_type<tc>, window_params = [{transform_indices = @transform_0, window_bounds = array<i64: 6, 16, 128>}, {transform_indices = @transform_1, window_bounds = array<i64: 1, 128>}, {transform_indices = @transform_2, window_bounds = array<i64: 3, 16, 128>}]} {
    %c0 = arith.constant 0 : index
    %c0_0 = arith.constant 0 : index
    %c0_1 = arith.constant 0 : index
    %0 = vector.load %arg1[%c0, %c0_0, %c0_1] : memref<6x16x128xf32, #tpu.memory_space<vmem>>, vector<6x16x128xf32>
    %1 = vector.extract_strided_slice %0 {offsets = [0, 0, 0], sizes = [3, 16, 128], strides = [1, 1, 1]} : vector<6x16x128xf32> to vector<3x16x128xf32>
    %2 = vector.extract_strided_slice %0 {offsets = [3, 0, 0], sizes = [3, 16, 128], strides = [1, 1, 1]} : vector<6x16x128xf32> to vector<3x16x128xf32>
    %3 = tpu.iota {dimensions = array<i32: 1>} : vector<3x16x128xi32>
    %c0_2 = arith.constant 0 : index
    %c0_3 = arith.constant 0 : index
    %4 = vector.load %arg2[%c0_2, %c0_3] : memref<1x128xi32, #tpu.memory_space<vmem>>, vector<1x128xi32>
    %5 = vector.shape_cast %4 : vector<1x128xi32> to vector<1x1x128xi32>
    %6 = vector.shape_cast %5 : vector<1x1x128xi32> to vector<1x1x128xi32>
    %7 = vector.broadcast %6 : vector<1x1x128xi32> to vector<3x16x128xi32>
    %c2_i32 = arith.constant 2 : i32
    %8 = vector.broadcast %c2_i32 : i32 to vector<3x16x128xi32>
    %9 = arith.cmpi slt, %7, %8 : vector<3x16x128xi32>
    %c1_i32 = arith.constant 1 : i32
    %10 = vector.broadcast %c1_i32 : i32 to vector<3x16x128xi32>
    %11 = arith.cmpi slt, %7, %10 : vector<3x16x128xi32>
    %c15_i32 = arith.constant 15 : i32
    %12 = vector.broadcast %c15_i32 : i32 to vector<3x16x128xi32>
    %13 = arith.cmpi sge, %7, %12 : vector<3x16x128xi32>
    %c14_i32 = arith.constant 14 : i32
    %14 = vector.broadcast %c14_i32 : i32 to vector<3x16x128xi32>
    %15 = arith.cmpi sge, %7, %14 : vector<3x16x128xi32>
    %c2_i32_4 = arith.constant 2 : i32
    %16 = vector.broadcast %c2_i32_4 : i32 to vector<3x16x128xi32>
    %17 = arith.cmpi slt, %3, %16 : vector<3x16x128xi32>
    %18 = vector.extract_strided_slice %1 {offsets = [0, 14, 0], sizes = [3, 2, 128], strides = [1, 1, 1]} : vector<3x16x128xf32> to vector<3x2x128xf32>
    %19 = vector.extract_strided_slice %1 {offsets = [0, 0, 0], sizes = [3, 14, 128], strides = [1, 1, 1]} : vector<3x16x128xf32> to vector<3x14x128xf32>
    %20 = tpu.concatenate %18, %19 in 1 : vector<3x2x128xf32>, vector<3x14x128xf32> -> vector<3x16x128xf32>
    %21 = arith.select %17, %1, %20 : vector<3x16x128xi1>, vector<3x16x128xf32>
    %c2_i32_5 = arith.constant 2 : i32
    %22 = vector.broadcast %c2_i32_5 : i32 to vector<3x16x128xi32>
    %23 = arith.cmpi slt, %3, %22 : vector<3x16x128xi32>
    %24 = vector.extract_strided_slice %2 {offsets = [0, 14, 0], sizes = [3, 2, 128], strides = [1, 1, 1]} : vector<3x16x128xf32> to vector<3x2x128xf32>
    %25 = vector.extract_strided_slice %2 {offsets = [0, 0, 0], sizes = [3, 14, 128], strides = [1, 1, 1]} : vector<3x16x128xf32> to vector<3x14x128xf32>
    %26 = tpu.concatenate %24, %25 in 1 : vector<3x2x128xf32>, vector<3x14x128xf32> -> vector<3x16x128xf32>
    %27 = arith.select %23, %2, %26 : vector<3x16x128xi1>, vector<3x16x128xf32>
    %c1_i32_6 = arith.constant 1 : i32
    %28 = vector.broadcast %c1_i32_6 : i32 to vector<3x16x128xi32>
    %29 = arith.cmpi slt, %3, %28 : vector<3x16x128xi32>
    %30 = vector.extract_strided_slice %1 {offsets = [0, 15, 0], sizes = [3, 1, 128], strides = [1, 1, 1]} : vector<3x16x128xf32> to vector<3x1x128xf32>
    %31 = vector.extract_strided_slice %1 {offsets = [0, 0, 0], sizes = [3, 15, 128], strides = [1, 1, 1]} : vector<3x16x128xf32> to vector<3x15x128xf32>
    %32 = tpu.concatenate %30, %31 in 1 : vector<3x1x128xf32>, vector<3x15x128xf32> -> vector<3x16x128xf32>
    %33 = arith.select %29, %1, %32 : vector<3x16x128xi1>, vector<3x16x128xf32>
    %c1_i32_7 = arith.constant 1 : i32
    %34 = vector.broadcast %c1_i32_7 : i32 to vector<3x16x128xi32>
    %35 = arith.cmpi slt, %3, %34 : vector<3x16x128xi32>
    %36 = vector.extract_strided_slice %2 {offsets = [0, 15, 0], sizes = [3, 1, 128], strides = [1, 1, 1]} : vector<3x16x128xf32> to vector<3x1x128xf32>
    %37 = vector.extract_strided_slice %2 {offsets = [0, 0, 0], sizes = [3, 15, 128], strides = [1, 1, 1]} : vector<3x16x128xf32> to vector<3x15x128xf32>
    %38 = tpu.concatenate %36, %37 in 1 : vector<3x1x128xf32>, vector<3x15x128xf32> -> vector<3x16x128xf32>
    %39 = arith.select %35, %2, %38 : vector<3x16x128xi1>, vector<3x16x128xf32>
    %c15_i32_8 = arith.constant 15 : i32
    %40 = vector.broadcast %c15_i32_8 : i32 to vector<3x16x128xi32>
    %41 = arith.cmpi sge, %3, %40 : vector<3x16x128xi32>
    %42 = vector.extract_strided_slice %1 {offsets = [0, 1, 0], sizes = [3, 15, 128], strides = [1, 1, 1]} : vector<3x16x128xf32> to vector<3x15x128xf32>
    %43 = vector.extract_strided_slice %1 {offsets = [0, 0, 0], sizes = [3, 1, 128], strides = [1, 1, 1]} : vector<3x16x128xf32> to vector<3x1x128xf32>
    %44 = tpu.concatenate %42, %43 in 1 : vector<3x15x128xf32>, vector<3x1x128xf32> -> vector<3x16x128xf32>
    %45 = arith.select %41, %1, %44 : vector<3x16x128xi1>, vector<3x16x128xf32>
    %c15_i32_9 = arith.constant 15 : i32
    %46 = vector.broadcast %c15_i32_9 : i32 to vector<3x16x128xi32>
    %47 = arith.cmpi sge, %3, %46 : vector<3x16x128xi32>
    %48 = vector.extract_strided_slice %2 {offsets = [0, 1, 0], sizes = [3, 15, 128], strides = [1, 1, 1]} : vector<3x16x128xf32> to vector<3x15x128xf32>
    %49 = vector.extract_strided_slice %2 {offsets = [0, 0, 0], sizes = [3, 1, 128], strides = [1, 1, 1]} : vector<3x16x128xf32> to vector<3x1x128xf32>
    %50 = tpu.concatenate %48, %49 in 1 : vector<3x15x128xf32>, vector<3x1x128xf32> -> vector<3x16x128xf32>
    %51 = arith.select %47, %2, %50 : vector<3x16x128xi1>, vector<3x16x128xf32>
    %c14_i32_10 = arith.constant 14 : i32
    %52 = vector.broadcast %c14_i32_10 : i32 to vector<3x16x128xi32>
    %53 = arith.cmpi sge, %3, %52 : vector<3x16x128xi32>
    %54 = vector.extract_strided_slice %1 {offsets = [0, 2, 0], sizes = [3, 14, 128], strides = [1, 1, 1]} : vector<3x16x128xf32> to vector<3x14x128xf32>
    %55 = vector.extract_strided_slice %1 {offsets = [0, 0, 0], sizes = [3, 2, 128], strides = [1, 1, 1]} : vector<3x16x128xf32> to vector<3x2x128xf32>
    %56 = tpu.concatenate %54, %55 in 1 : vector<3x14x128xf32>, vector<3x2x128xf32> -> vector<3x16x128xf32>
    %57 = arith.select %53, %1, %56 : vector<3x16x128xi1>, vector<3x16x128xf32>
    %c14_i32_11 = arith.constant 14 : i32
    %58 = vector.broadcast %c14_i32_11 : i32 to vector<3x16x128xi32>
    %59 = arith.cmpi sge, %3, %58 : vector<3x16x128xi32>
    %60 = vector.extract_strided_slice %2 {offsets = [0, 2, 0], sizes = [3, 14, 128], strides = [1, 1, 1]} : vector<3x16x128xf32> to vector<3x14x128xf32>
    %61 = vector.extract_strided_slice %2 {offsets = [0, 0, 0], sizes = [3, 2, 128], strides = [1, 1, 1]} : vector<3x16x128xf32> to vector<3x2x128xf32>
    %62 = tpu.concatenate %60, %61 in 1 : vector<3x14x128xf32>, vector<3x2x128xf32> -> vector<3x16x128xf32>
    %63 = arith.select %59, %2, %62 : vector<3x16x128xi1>, vector<3x16x128xf32>
    %cst = arith.constant 0.000000e+00 : f32
    %64 = vector.broadcast %cst : f32 to vector<3x16x128xf32>
    %65 = arith.subf %1, %21 : vector<3x16x128xf32>
    %66 = arith.subf %2, %27 : vector<3x16x128xf32>
    %67 = arith.mulf %65, %65 : vector<3x16x128xf32>
    %cst_12 = arith.constant dense<0.000000e+00> : vector<16x128xf32>
    %68 = vector.multi_reduction <add>, %67, %cst_12 [0] : vector<3x16x128xf32> to vector<16x128xf32>
    %69 = vector.shape_cast %68 : vector<16x128xf32> to vector<1x16x128xf32>
    %cst_13 = arith.constant 9.99999971E-10 : f32
    %70 = vector.broadcast %cst_13 : f32 to vector<1x16x128xf32>
    %71 = arith.addf %69, %70 : vector<1x16x128xf32>
    %72 = math.rsqrt %71 : vector<1x16x128xf32>
    %73 = vector.broadcast %72 : vector<1x16x128xf32> to vector<3x16x128xf32>
    %74 = arith.mulf %65, %73 : vector<3x16x128xf32>
    %75 = arith.mulf %66, %74 : vector<3x16x128xf32>
    %cst_14 = arith.constant dense<0.000000e+00> : vector<16x128xf32>
    %76 = vector.multi_reduction <add>, %75, %cst_14 [0] : vector<3x16x128xf32> to vector<16x128xf32>
    %77 = vector.shape_cast %76 : vector<16x128xf32> to vector<1x16x128xf32>
    %cst_15 = arith.constant 0.0731735527 : f32
    %78 = vector.broadcast %cst_15 : f32 to vector<1x16x128xf32>
    %79 = arith.mulf %78, %77 : vector<1x16x128xf32>
    %cst_16 = arith.constant 3.12207174 : f32
    %80 = vector.broadcast %cst_16 : f32 to vector<1x16x128xf32>
    %81 = arith.subf %80, %79 : vector<1x16x128xf32>
    %82 = vector.broadcast %81 : vector<1x16x128xf32> to vector<3x16x128xf32>
    %83 = arith.mulf %74, %82 : vector<3x16x128xf32>
    %cst_17 = arith.constant 199.812592 : f32
    %84 = vector.broadcast %cst_17 : f32 to vector<3x16x128xf32>
    %85 = arith.mulf %84, %65 : vector<3x16x128xf32>
    %86 = arith.subf %83, %85 : vector<3x16x128xf32>
    %87 = arith.addf %64, %86 : vector<3x16x128xf32>
    %88 = vector.extract_strided_slice %1 {offsets = [0, 0, 2], sizes = [3, 16, 126], strides = [1, 1, 1]} : vector<3x16x128xf32> to vector<3x16x126xf32>
    %89 = vector.extract_strided_slice %1 {offsets = [0, 0, 0], sizes = [3, 16, 2], strides = [1, 1, 1]} : vector<3x16x128xf32> to vector<3x16x2xf32>
    %90 = tpu.concatenate %88, %89 in 2 : vector<3x16x126xf32>, vector<3x16x2xf32> -> vector<3x16x128xf32>
    %91 = arith.select %15, %1, %90 : vector<3x16x128xi1>, vector<3x16x128xf32>
    %92 = arith.subf %1, %91 : vector<3x16x128xf32>
    %93 = vector.extract_strided_slice %2 {offsets = [0, 0, 2], sizes = [3, 16, 126], strides = [1, 1, 1]} : vector<3x16x128xf32> to vector<3x16x126xf32>
    %94 = vector.extract_strided_slice %2 {offsets = [0, 0, 0], sizes = [3, 16, 2], strides = [1, 1, 1]} : vector<3x16x128xf32> to vector<3x16x2xf32>
    %95 = tpu.concatenate %93, %94 in 2 : vector<3x16x126xf32>, vector<3x16x2xf32> -> vector<3x16x128xf32>
    %96 = arith.select %15, %2, %95 : vector<3x16x128xi1>, vector<3x16x128xf32>
    %97 = arith.subf %2, %96 : vector<3x16x128xf32>
    %98 = arith.mulf %92, %92 : vector<3x16x128xf32>
    %cst_18 = arith.constant dense<0.000000e+00> : vector<16x128xf32>
    %99 = vector.multi_reduction <add>, %98, %cst_18 [0] : vector<3x16x128xf32> to vector<16x128xf32>
    %100 = vector.shape_cast %99 : vector<16x128xf32> to vector<1x16x128xf32>
    %cst_19 = arith.constant 9.99999971E-10 : f32
    %101 = vector.broadcast %cst_19 : f32 to vector<1x16x128xf32>
    %102 = arith.addf %100, %101 : vector<1x16x128xf32>
    %103 = math.rsqrt %102 : vector<1x16x128xf32>
    %104 = vector.broadcast %103 : vector<1x16x128xf32> to vector<3x16x128xf32>
    %105 = arith.mulf %92, %104 : vector<3x16x128xf32>
    %106 = arith.mulf %97, %105 : vector<3x16x128xf32>
    %cst_20 = arith.constant dense<0.000000e+00> : vector<16x128xf32>
    %107 = vector.multi_reduction <add>, %106, %cst_20 [0] : vector<3x16x128xf32> to vector<16x128xf32>
    %108 = vector.shape_cast %107 : vector<16x128xf32> to vector<1x16x128xf32>
    %cst_21 = arith.constant 0.0731735527 : f32
    %109 = vector.broadcast %cst_21 : f32 to vector<1x16x128xf32>
    %110 = arith.mulf %109, %108 : vector<1x16x128xf32>
    %cst_22 = arith.constant 3.12207174 : f32
    %111 = vector.broadcast %cst_22 : f32 to vector<1x16x128xf32>
    %112 = arith.subf %111, %110 : vector<1x16x128xf32>
    %113 = vector.broadcast %112 : vector<1x16x128xf32> to vector<3x16x128xf32>
    %114 = arith.mulf %105, %113 : vector<3x16x128xf32>
    %cst_23 = arith.constant 199.812592 : f32
    %115 = vector.broadcast %cst_23 : f32 to vector<3x16x128xf32>
    %116 = arith.mulf %115, %92 : vector<3x16x128xf32>
    %117 = arith.subf %114, %116 : vector<3x16x128xf32>
    %118 = arith.addf %87, %117 : vector<3x16x128xf32>
    %119 = arith.subf %1, %57 : vector<3x16x128xf32>
    %120 = arith.subf %2, %63 : vector<3x16x128xf32>
    %121 = arith.mulf %119, %119 : vector<3x16x128xf32>
    %cst_24 = arith.constant dense<0.000000e+00> : vector<16x128xf32>
    %122 = vector.multi_reduction <add>, %121, %cst_24 [0] : vector<3x16x128xf32> to vector<16x128xf32>
    %123 = vector.shape_cast %122 : vector<16x128xf32> to vector<1x16x128xf32>
    %cst_25 = arith.constant 9.99999971E-10 : f32
    %124 = vector.broadcast %cst_25 : f32 to vector<1x16x128xf32>
    %125 = arith.addf %123, %124 : vector<1x16x128xf32>
    %126 = math.rsqrt %125 : vector<1x16x128xf32>
    %127 = vector.broadcast %126 : vector<1x16x128xf32> to vector<3x16x128xf32>
    %128 = arith.mulf %119, %127 : vector<3x16x128xf32>
    %129 = arith.mulf %120, %128 : vector<3x16x128xf32>
    %cst_26 = arith.constant dense<0.000000e+00> : vector<16x128xf32>
    %130 = vector.multi_reduction <add>, %129, %cst_26 [0] : vector<3x16x128xf32> to vector<16x128xf32>
    %131 = vector.shape_cast %130 : vector<16x128xf32> to vector<1x16x128xf32>
    %cst_27 = arith.constant 0.0731735527 : f32
    %132 = vector.broadcast %cst_27 : f32 to vector<1x16x128xf32>
    %133 = arith.mulf %132, %131 : vector<1x16x128xf32>
    %cst_28 = arith.constant 3.12207174 : f32
    %134 = vector.broadcast %cst_28 : f32 to vector<1x16x128xf32>
    %135 = arith.subf %134, %133 : vector<1x16x128xf32>
    %136 = vector.broadcast %135 : vector<1x16x128xf32> to vector<3x16x128xf32>
    %137 = arith.mulf %128, %136 : vector<3x16x128xf32>
    %cst_29 = arith.constant 199.812592 : f32
    %138 = vector.broadcast %cst_29 : f32 to vector<3x16x128xf32>
    %139 = arith.mulf %138, %119 : vector<3x16x128xf32>
    %140 = arith.subf %137, %139 : vector<3x16x128xf32>
    %141 = arith.addf %118, %140 : vector<3x16x128xf32>
    %142 = vector.extract_strided_slice %1 {offsets = [0, 0, 126], sizes = [3, 16, 2], strides = [1, 1, 1]} : vector<3x16x128xf32> to vector<3x16x2xf32>
    %143 = vector.extract_strided_slice %1 {offsets = [0, 0, 0], sizes = [3, 16, 126], strides = [1, 1, 1]} : vector<3x16x128xf32> to vector<3x16x126xf32>
    %144 = tpu.concatenate %142, %143 in 2 : vector<3x16x2xf32>, vector<3x16x126xf32> -> vector<3x16x128xf32>
    %145 = arith.select %9, %1, %144 : vector<3x16x128xi1>, vector<3x16x128xf32>
    %146 = arith.subf %1, %145 : vector<3x16x128xf32>
    %147 = vector.extract_strided_slice %2 {offsets = [0, 0, 126], sizes = [3, 16, 2], strides = [1, 1, 1]} : vector<3x16x128xf32> to vector<3x16x2xf32>
    %148 = vector.extract_strided_slice %2 {offsets = [0, 0, 0], sizes = [3, 16, 126], strides = [1, 1, 1]} : vector<3x16x128xf32> to vector<3x16x126xf32>
    %149 = tpu.concatenate %147, %148 in 2 : vector<3x16x2xf32>, vector<3x16x126xf32> -> vector<3x16x128xf32>
    %150 = arith.select %9, %2, %149 : vector<3x16x128xi1>, vector<3x16x128xf32>
    %151 = arith.subf %2, %150 : vector<3x16x128xf32>
    %152 = arith.mulf %146, %146 : vector<3x16x128xf32>
    %cst_30 = arith.constant dense<0.000000e+00> : vector<16x128xf32>
    %153 = vector.multi_reduction <add>, %152, %cst_30 [0] : vector<3x16x128xf32> to vector<16x128xf32>
    %154 = vector.shape_cast %153 : vector<16x128xf32> to vector<1x16x128xf32>
    %cst_31 = arith.constant 9.99999971E-10 : f32
    %155 = vector.broadcast %cst_31 : f32 to vector<1x16x128xf32>
    %156 = arith.addf %154, %155 : vector<1x16x128xf32>
    %157 = math.rsqrt %156 : vector<1x16x128xf32>
    %158 = vector.broadcast %157 : vector<1x16x128xf32> to vector<3x16x128xf32>
    %159 = arith.mulf %146, %158 : vector<3x16x128xf32>
    %160 = arith.mulf %151, %159 : vector<3x16x128xf32>
    %cst_32 = arith.constant dense<0.000000e+00> : vector<16x128xf32>
    %161 = vector.multi_reduction <add>, %160, %cst_32 [0] : vector<3x16x128xf32> to vector<16x128xf32>
    %162 = vector.shape_cast %161 : vector<16x128xf32> to vector<1x16x128xf32>
    %cst_33 = arith.constant 0.0731735527 : f32
    %163 = vector.broadcast %cst_33 : f32 to vector<1x16x128xf32>
    %164 = arith.mulf %163, %162 : vector<1x16x128xf32>
    %cst_34 = arith.constant 3.12207174 : f32
    %165 = vector.broadcast %cst_34 : f32 to vector<1x16x128xf32>
    %166 = arith.subf %165, %164 : vector<1x16x128xf32>
    %167 = vector.broadcast %166 : vector<1x16x128xf32> to vector<3x16x128xf32>
    %168 = arith.mulf %159, %167 : vector<3x16x128xf32>
    %cst_35 = arith.constant 199.812592 : f32
    %169 = vector.broadcast %cst_35 : f32 to vector<3x16x128xf32>
    %170 = arith.mulf %169, %146 : vector<3x16x128xf32>
    %171 = arith.subf %168, %170 : vector<3x16x128xf32>
    %172 = arith.addf %141, %171 : vector<3x16x128xf32>
    %173 = arith.subf %1, %33 : vector<3x16x128xf32>
    %174 = arith.subf %2, %39 : vector<3x16x128xf32>
    %175 = arith.mulf %173, %173 : vector<3x16x128xf32>
    %cst_36 = arith.constant dense<0.000000e+00> : vector<16x128xf32>
    %176 = vector.multi_reduction <add>, %175, %cst_36 [0] : vector<3x16x128xf32> to vector<16x128xf32>
    %177 = vector.shape_cast %176 : vector<16x128xf32> to vector<1x16x128xf32>
    %cst_37 = arith.constant 9.99999971E-10 : f32
    %178 = vector.broadcast %cst_37 : f32 to vector<1x16x128xf32>
    %179 = arith.addf %177, %178 : vector<1x16x128xf32>
    %180 = math.rsqrt %179 : vector<1x16x128xf32>
    %181 = vector.broadcast %180 : vector<1x16x128xf32> to vector<3x16x128xf32>
    %182 = arith.mulf %173, %181 : vector<3x16x128xf32>
    %183 = arith.mulf %174, %182 : vector<3x16x128xf32>
    %cst_38 = arith.constant dense<0.000000e+00> : vector<16x128xf32>
    %184 = vector.multi_reduction <add>, %183, %cst_38 [0] : vector<3x16x128xf32> to vector<16x128xf32>
    %185 = vector.shape_cast %184 : vector<16x128xf32> to vector<1x16x128xf32>
    %cst_39 = arith.constant 0.0731735527 : f32
    %186 = vector.broadcast %cst_39 : f32 to vector<1x16x128xf32>
    %187 = arith.mulf %186, %185 : vector<1x16x128xf32>
    %cst_40 = arith.constant 3.12207174 : f32
    %188 = vector.broadcast %cst_40 : f32 to vector<1x16x128xf32>
    %189 = arith.subf %188, %187 : vector<1x16x128xf32>
    %190 = vector.broadcast %189 : vector<1x16x128xf32> to vector<3x16x128xf32>
    %191 = arith.mulf %182, %190 : vector<3x16x128xf32>
    %cst_41 = arith.constant 399.625183 : f32
    %192 = vector.broadcast %cst_41 : f32 to vector<3x16x128xf32>
    %193 = arith.mulf %192, %173 : vector<3x16x128xf32>
    %194 = arith.subf %191, %193 : vector<3x16x128xf32>
    %195 = arith.addf %172, %194 : vector<3x16x128xf32>
    %196 = vector.extract_strided_slice %33 {offsets = [0, 0, 1], sizes = [3, 16, 127], strides = [1, 1, 1]} : vector<3x16x128xf32> to vector<3x16x127xf32>
    %197 = vector.extract_strided_slice %33 {offsets = [0, 0, 0], sizes = [3, 16, 1], strides = [1, 1, 1]} : vector<3x16x128xf32> to vector<3x16x1xf32>
    %198 = tpu.concatenate %196, %197 in 2 : vector<3x16x127xf32>, vector<3x16x1xf32> -> vector<3x16x128xf32>
    %199 = arith.select %13, %33, %198 : vector<3x16x128xi1>, vector<3x16x128xf32>
    %200 = arith.subf %1, %199 : vector<3x16x128xf32>
    %201 = vector.extract_strided_slice %39 {offsets = [0, 0, 1], sizes = [3, 16, 127], strides = [1, 1, 1]} : vector<3x16x128xf32> to vector<3x16x127xf32>
    %202 = vector.extract_strided_slice %39 {offsets = [0, 0, 0], sizes = [3, 16, 1], strides = [1, 1, 1]} : vector<3x16x128xf32> to vector<3x16x1xf32>
    %203 = tpu.concatenate %201, %202 in 2 : vector<3x16x127xf32>, vector<3x16x1xf32> -> vector<3x16x128xf32>
    %204 = arith.select %13, %39, %203 : vector<3x16x128xi1>, vector<3x16x128xf32>
    %205 = arith.subf %2, %204 : vector<3x16x128xf32>
    %206 = arith.mulf %200, %200 : vector<3x16x128xf32>
    %cst_42 = arith.constant dense<0.000000e+00> : vector<16x128xf32>
    %207 = vector.multi_reduction <add>, %206, %cst_42 [0] : vector<3x16x128xf32> to vector<16x128xf32>
    %208 = vector.shape_cast %207 : vector<16x128xf32> to vector<1x16x128xf32>
    %cst_43 = arith.constant 9.99999971E-10 : f32
    %209 = vector.broadcast %cst_43 : f32 to vector<1x16x128xf32>
    %210 = arith.addf %208, %209 : vector<1x16x128xf32>
    %211 = math.rsqrt %210 : vector<1x16x128xf32>
    %212 = vector.broadcast %211 : vector<1x16x128xf32> to vector<3x16x128xf32>
    %213 = arith.mulf %200, %212 : vector<3x16x128xf32>
    %214 = arith.mulf %205, %213 : vector<3x16x128xf32>
    %cst_44 = arith.constant dense<0.000000e+00> : vector<16x128xf32>
    %215 = vector.multi_reduction <add>, %214, %cst_44 [0] : vector<3x16x128xf32> to vector<16x128xf32>
    %216 = vector.shape_cast %215 : vector<16x128xf32> to vector<1x16x128xf32>
    %cst_45 = arith.constant 0.0731735527 : f32
    %217 = vector.broadcast %cst_45 : f32 to vector<1x16x128xf32>
    %218 = arith.mulf %217, %216 : vector<1x16x128xf32>
    %cst_46 = arith.constant 3.12207174 : f32
    %219 = vector.broadcast %cst_46 : f32 to vector<1x16x128xf32>
    %220 = arith.subf %219, %218 : vector<1x16x128xf32>
    %221 = vector.broadcast %220 : vector<1x16x128xf32> to vector<3x16x128xf32>
    %222 = arith.mulf %213, %221 : vector<3x16x128xf32>
    %cst_47 = arith.constant 282.577667 : f32
    %223 = vector.broadcast %cst_47 : f32 to vector<3x16x128xf32>
    %224 = arith.mulf %223, %200 : vector<3x16x128xf32>
    %225 = arith.subf %222, %224 : vector<3x16x128xf32>
    %226 = arith.addf %195, %225 : vector<3x16x128xf32>
    %227 = vector.extract_strided_slice %1 {offsets = [0, 0, 1], sizes = [3, 16, 127], strides = [1, 1, 1]} : vector<3x16x128xf32> to vector<3x16x127xf32>
    %228 = vector.extract_strided_slice %1 {offsets = [0, 0, 0], sizes = [3, 16, 1], strides = [1, 1, 1]} : vector<3x16x128xf32> to vector<3x16x1xf32>
    %229 = tpu.concatenate %227, %228 in 2 : vector<3x16x127xf32>, vector<3x16x1xf32> -> vector<3x16x128xf32>
    %230 = arith.select %13, %1, %229 : vector<3x16x128xi1>, vector<3x16x128xf32>
    %231 = arith.subf %1, %230 : vector<3x16x128xf32>
    %232 = vector.extract_strided_slice %2 {offsets = [0, 0, 1], sizes = [3, 16, 127], strides = [1, 1, 1]} : vector<3x16x128xf32> to vector<3x16x127xf32>
    %233 = vector.extract_strided_slice %2 {offsets = [0, 0, 0], sizes = [3, 16, 1], strides = [1, 1, 1]} : vector<3x16x128xf32> to vector<3x16x1xf32>
    %234 = tpu.concatenate %232, %233 in 2 : vector<3x16x127xf32>, vector<3x16x1xf32> -> vector<3x16x128xf32>
    %235 = arith.select %13, %2, %234 : vector<3x16x128xi1>, vector<3x16x128xf32>
    %236 = arith.subf %2, %235 : vector<3x16x128xf32>
    %237 = arith.mulf %231, %231 : vector<3x16x128xf32>
    %cst_48 = arith.constant dense<0.000000e+00> : vector<16x128xf32>
    %238 = vector.multi_reduction <add>, %237, %cst_48 [0] : vector<3x16x128xf32> to vector<16x128xf32>
    %239 = vector.shape_cast %238 : vector<16x128xf32> to vector<1x16x128xf32>
    %cst_49 = arith.constant 9.99999971E-10 : f32
    %240 = vector.broadcast %cst_49 : f32 to vector<1x16x128xf32>
    %241 = arith.addf %239, %240 : vector<1x16x128xf32>
    %242 = math.rsqrt %241 : vector<1x16x128xf32>
    %243 = vector.broadcast %242 : vector<1x16x128xf32> to vector<3x16x128xf32>
    %244 = arith.mulf %231, %243 : vector<3x16x128xf32>
    %245 = arith.mulf %236, %244 : vector<3x16x128xf32>
    %cst_50 = arith.constant dense<0.000000e+00> : vector<16x128xf32>
    %246 = vector.multi_reduction <add>, %245, %cst_50 [0] : vector<3x16x128xf32> to vector<16x128xf32>
    %247 = vector.shape_cast %246 : vector<16x128xf32> to vector<1x16x128xf32>
    %cst_51 = arith.constant 0.0731735527 : f32
    %248 = vector.broadcast %cst_51 : f32 to vector<1x16x128xf32>
    %249 = arith.mulf %248, %247 : vector<1x16x128xf32>
    %cst_52 = arith.constant 3.12207174 : f32
    %250 = vector.broadcast %cst_52 : f32 to vector<1x16x128xf32>
    %251 = arith.subf %250, %249 : vector<1x16x128xf32>
    %252 = vector.broadcast %251 : vector<1x16x128xf32> to vector<3x16x128xf32>
    %253 = arith.mulf %244, %252 : vector<3x16x128xf32>
    %cst_53 = arith.constant 399.625183 : f32
    %254 = vector.broadcast %cst_53 : f32 to vector<3x16x128xf32>
    %255 = arith.mulf %254, %231 : vector<3x16x128xf32>
    %256 = arith.subf %253, %255 : vector<3x16x128xf32>
    %257 = arith.addf %226, %256 : vector<3x16x128xf32>
    %258 = vector.extract_strided_slice %45 {offsets = [0, 0, 1], sizes = [3, 16, 127], strides = [1, 1, 1]} : vector<3x16x128xf32> to vector<3x16x127xf32>
    %259 = vector.extract_strided_slice %45 {offsets = [0, 0, 0], sizes = [3, 16, 1], strides = [1, 1, 1]} : vector<3x16x128xf32> to vector<3x16x1xf32>
    %260 = tpu.concatenate %258, %259 in 2 : vector<3x16x127xf32>, vector<3x16x1xf32> -> vector<3x16x128xf32>
    %261 = arith.select %13, %45, %260 : vector<3x16x128xi1>, vector<3x16x128xf32>
    %262 = arith.subf %1, %261 : vector<3x16x128xf32>
    %263 = vector.extract_strided_slice %51 {offsets = [0, 0, 1], sizes = [3, 16, 127], strides = [1, 1, 1]} : vector<3x16x128xf32> to vector<3x16x127xf32>
    %264 = vector.extract_strided_slice %51 {offsets = [0, 0, 0], sizes = [3, 16, 1], strides = [1, 1, 1]} : vector<3x16x128xf32> to vector<3x16x1xf32>
    %265 = tpu.concatenate %263, %264 in 2 : vector<3x16x127xf32>, vector<3x16x1xf32> -> vector<3x16x128xf32>
    %266 = arith.select %13, %51, %265 : vector<3x16x128xi1>, vector<3x16x128xf32>
    %267 = arith.subf %2, %266 : vector<3x16x128xf32>
    %268 = arith.mulf %262, %262 : vector<3x16x128xf32>
    %cst_54 = arith.constant dense<0.000000e+00> : vector<16x128xf32>
    %269 = vector.multi_reduction <add>, %268, %cst_54 [0] : vector<3x16x128xf32> to vector<16x128xf32>
    %270 = vector.shape_cast %269 : vector<16x128xf32> to vector<1x16x128xf32>
    %cst_55 = arith.constant 9.99999971E-10 : f32
    %271 = vector.broadcast %cst_55 : f32 to vector<1x16x128xf32>
    %272 = arith.addf %270, %271 : vector<1x16x128xf32>
    %273 = math.rsqrt %272 : vector<1x16x128xf32>
    %274 = vector.broadcast %273 : vector<1x16x128xf32> to vector<3x16x128xf32>
    %275 = arith.mulf %262, %274 : vector<3x16x128xf32>
    %276 = arith.mulf %267, %275 : vector<3x16x128xf32>
    %cst_56 = arith.constant dense<0.000000e+00> : vector<16x128xf32>
    %277 = vector.multi_reduction <add>, %276, %cst_56 [0] : vector<3x16x128xf32> to vector<16x128xf32>
    %278 = vector.shape_cast %277 : vector<16x128xf32> to vector<1x16x128xf32>
    %cst_57 = arith.constant 0.0731735527 : f32
    %279 = vector.broadcast %cst_57 : f32 to vector<1x16x128xf32>
    %280 = arith.mulf %279, %278 : vector<1x16x128xf32>
    %cst_58 = arith.constant 3.12207174 : f32
    %281 = vector.broadcast %cst_58 : f32 to vector<1x16x128xf32>
    %282 = arith.subf %281, %280 : vector<1x16x128xf32>
    %283 = vector.broadcast %282 : vector<1x16x128xf32> to vector<3x16x128xf32>
    %284 = arith.mulf %275, %283 : vector<3x16x128xf32>
    %cst_59 = arith.constant 282.577667 : f32
    %285 = vector.broadcast %cst_59 : f32 to vector<3x16x128xf32>
    %286 = arith.mulf %285, %262 : vector<3x16x128xf32>
    %287 = arith.subf %284, %286 : vector<3x16x128xf32>
    %288 = arith.addf %257, %287 : vector<3x16x128xf32>
    %289 = arith.subf %1, %45 : vector<3x16x128xf32>
    %290 = arith.subf %2, %51 : vector<3x16x128xf32>
    %291 = arith.mulf %289, %289 : vector<3x16x128xf32>
    %cst_60 = arith.constant dense<0.000000e+00> : vector<16x128xf32>
    %292 = vector.multi_reduction <add>, %291, %cst_60 [0] : vector<3x16x128xf32> to vector<16x128xf32>
    %293 = vector.shape_cast %292 : vector<16x128xf32> to vector<1x16x128xf32>
    %cst_61 = arith.constant 9.99999971E-10 : f32
    %294 = vector.broadcast %cst_61 : f32 to vector<1x16x128xf32>
    %295 = arith.addf %293, %294 : vector<1x16x128xf32>
    %296 = math.rsqrt %295 : vector<1x16x128xf32>
    %297 = vector.broadcast %296 : vector<1x16x128xf32> to vector<3x16x128xf32>
    %298 = arith.mulf %289, %297 : vector<3x16x128xf32>
    %299 = arith.mulf %290, %298 : vector<3x16x128xf32>
    %cst_62 = arith.constant dense<0.000000e+00> : vector<16x128xf32>
    %300 = vector.multi_reduction <add>, %299, %cst_62 [0] : vector<3x16x128xf32> to vector<16x128xf32>
    %301 = vector.shape_cast %300 : vector<16x128xf32> to vector<1x16x128xf32>
    %cst_63 = arith.constant 0.0731735527 : f32
    %302 = vector.broadcast %cst_63 : f32 to vector<1x16x128xf32>
    %303 = arith.mulf %302, %301 : vector<1x16x128xf32>
    %cst_64 = arith.constant 3.12207174 : f32
    %304 = vector.broadcast %cst_64 : f32 to vector<1x16x128xf32>
    %305 = arith.subf %304, %303 : vector<1x16x128xf32>
    %306 = vector.broadcast %305 : vector<1x16x128xf32> to vector<3x16x128xf32>
    %307 = arith.mulf %298, %306 : vector<3x16x128xf32>
    %cst_65 = arith.constant 399.625183 : f32
    %308 = vector.broadcast %cst_65 : f32 to vector<3x16x128xf32>
    %309 = arith.mulf %308, %289 : vector<3x16x128xf32>
    %310 = arith.subf %307, %309 : vector<3x16x128xf32>
    %311 = arith.addf %288, %310 : vector<3x16x128xf32>
    %312 = vector.extract_strided_slice %45 {offsets = [0, 0, 127], sizes = [3, 16, 1], strides = [1, 1, 1]} : vector<3x16x128xf32> to vector<3x16x1xf32>
    %313 = vector.extract_strided_slice %45 {offsets = [0, 0, 0], sizes = [3, 16, 127], strides = [1, 1, 1]} : vector<3x16x128xf32> to vector<3x16x127xf32>
    %314 = tpu.concatenate %312, %313 in 2 : vector<3x16x1xf32>, vector<3x16x127xf32> -> vector<3x16x128xf32>
    %315 = arith.select %11, %45, %314 : vector<3x16x128xi1>, vector<3x16x128xf32>
    %316 = arith.subf %1, %315 : vector<3x16x128xf32>
    %317 = vector.extract_strided_slice %51 {offsets = [0, 0, 127], sizes = [3, 16, 1], strides = [1, 1, 1]} : vector<3x16x128xf32> to vector<3x16x1xf32>
    %318 = vector.extract_strided_slice %51 {offsets = [0, 0, 0], sizes = [3, 16, 127], strides = [1, 1, 1]} : vector<3x16x128xf32> to vector<3x16x127xf32>
    %319 = tpu.concatenate %317, %318 in 2 : vector<3x16x1xf32>, vector<3x16x127xf32> -> vector<3x16x128xf32>
    %320 = arith.select %11, %51, %319 : vector<3x16x128xi1>, vector<3x16x128xf32>
    %321 = arith.subf %2, %320 : vector<3x16x128xf32>
    %322 = arith.mulf %316, %316 : vector<3x16x128xf32>
    %cst_66 = arith.constant dense<0.000000e+00> : vector<16x128xf32>
    %323 = vector.multi_reduction <add>, %322, %cst_66 [0] : vector<3x16x128xf32> to vector<16x128xf32>
    %324 = vector.shape_cast %323 : vector<16x128xf32> to vector<1x16x128xf32>
    %cst_67 = arith.constant 9.99999971E-10 : f32
    %325 = vector.broadcast %cst_67 : f32 to vector<1x16x128xf32>
    %326 = arith.addf %324, %325 : vector<1x16x128xf32>
    %327 = math.rsqrt %326 : vector<1x16x128xf32>
    %328 = vector.broadcast %327 : vector<1x16x128xf32> to vector<3x16x128xf32>
    %329 = arith.mulf %316, %328 : vector<3x16x128xf32>
    %330 = arith.mulf %321, %329 : vector<3x16x128xf32>
    %cst_68 = arith.constant dense<0.000000e+00> : vector<16x128xf32>
    %331 = vector.multi_reduction <add>, %330, %cst_68 [0] : vector<3x16x128xf32> to vector<16x128xf32>
    %332 = vector.shape_cast %331 : vector<16x128xf32> to vector<1x16x128xf32>
    %cst_69 = arith.constant 0.0731735527 : f32
    %333 = vector.broadcast %cst_69 : f32 to vector<1x16x128xf32>
    %334 = arith.mulf %333, %332 : vector<1x16x128xf32>
    %cst_70 = arith.constant 3.12207174 : f32
    %335 = vector.broadcast %cst_70 : f32 to vector<1x16x128xf32>
    %336 = arith.subf %335, %334 : vector<1x16x128xf32>
    %337 = vector.broadcast %336 : vector<1x16x128xf32> to vector<3x16x128xf32>
    %338 = arith.mulf %329, %337 : vector<3x16x128xf32>
    %cst_71 = arith.constant 282.577667 : f32
    %339 = vector.broadcast %cst_71 : f32 to vector<3x16x128xf32>
    %340 = arith.mulf %339, %316 : vector<3x16x128xf32>
    %341 = arith.subf %338, %340 : vector<3x16x128xf32>
    %342 = arith.addf %311, %341 : vector<3x16x128xf32>
    %343 = vector.extract_strided_slice %1 {offsets = [0, 0, 127], sizes = [3, 16, 1], strides = [1, 1, 1]} : vector<3x16x128xf32> to vector<3x16x1xf32>
    %344 = vector.extract_strided_slice %1 {offsets = [0, 0, 0], sizes = [3, 16, 127], strides = [1, 1, 1]} : vector<3x16x128xf32> to vector<3x16x127xf32>
    %345 = tpu.concatenate %343, %344 in 2 : vector<3x16x1xf32>, vector<3x16x127xf32> -> vector<3x16x128xf32>
    %346 = arith.select %11, %1, %345 : vector<3x16x128xi1>, vector<3x16x128xf32>
    %347 = arith.subf %1, %346 : vector<3x16x128xf32>
    %348 = vector.extract_strided_slice %2 {offsets = [0, 0, 127], sizes = [3, 16, 1], strides = [1, 1, 1]} : vector<3x16x128xf32> to vector<3x16x1xf32>
    %349 = vector.extract_strided_slice %2 {offsets = [0, 0, 0], sizes = [3, 16, 127], strides = [1, 1, 1]} : vector<3x16x128xf32> to vector<3x16x127xf32>
    %350 = tpu.concatenate %348, %349 in 2 : vector<3x16x1xf32>, vector<3x16x127xf32> -> vector<3x16x128xf32>
    %351 = arith.select %11, %2, %350 : vector<3x16x128xi1>, vector<3x16x128xf32>
    %352 = arith.subf %2, %351 : vector<3x16x128xf32>
    %353 = arith.mulf %347, %347 : vector<3x16x128xf32>
    %cst_72 = arith.constant dense<0.000000e+00> : vector<16x128xf32>
    %354 = vector.multi_reduction <add>, %353, %cst_72 [0] : vector<3x16x128xf32> to vector<16x128xf32>
    %355 = vector.shape_cast %354 : vector<16x128xf32> to vector<1x16x128xf32>
    %cst_73 = arith.constant 9.99999971E-10 : f32
    %356 = vector.broadcast %cst_73 : f32 to vector<1x16x128xf32>
    %357 = arith.addf %355, %356 : vector<1x16x128xf32>
    %358 = math.rsqrt %357 : vector<1x16x128xf32>
    %359 = vector.broadcast %358 : vector<1x16x128xf32> to vector<3x16x128xf32>
    %360 = arith.mulf %347, %359 : vector<3x16x128xf32>
    %361 = arith.mulf %352, %360 : vector<3x16x128xf32>
    %cst_74 = arith.constant dense<0.000000e+00> : vector<16x128xf32>
    %362 = vector.multi_reduction <add>, %361, %cst_74 [0] : vector<3x16x128xf32> to vector<16x128xf32>
    %363 = vector.shape_cast %362 : vector<16x128xf32> to vector<1x16x128xf32>
    %cst_75 = arith.constant 0.0731735527 : f32
    %364 = vector.broadcast %cst_75 : f32 to vector<1x16x128xf32>
    %365 = arith.mulf %364, %363 : vector<1x16x128xf32>
    %cst_76 = arith.constant 3.12207174 : f32
    %366 = vector.broadcast %cst_76 : f32 to vector<1x16x128xf32>
    %367 = arith.subf %366, %365 : vector<1x16x128xf32>
    %368 = vector.broadcast %367 : vector<1x16x128xf32> to vector<3x16x128xf32>
    %369 = arith.mulf %360, %368 : vector<3x16x128xf32>
    %cst_77 = arith.constant 399.625183 : f32
    %370 = vector.broadcast %cst_77 : f32 to vector<3x16x128xf32>
    %371 = arith.mulf %370, %347 : vector<3x16x128xf32>
    %372 = arith.subf %369, %371 : vector<3x16x128xf32>
    %373 = arith.addf %342, %372 : vector<3x16x128xf32>
    %374 = vector.extract_strided_slice %33 {offsets = [0, 0, 127], sizes = [3, 16, 1], strides = [1, 1, 1]} : vector<3x16x128xf32> to vector<3x16x1xf32>
    %375 = vector.extract_strided_slice %33 {offsets = [0, 0, 0], sizes = [3, 16, 127], strides = [1, 1, 1]} : vector<3x16x128xf32> to vector<3x16x127xf32>
    %376 = tpu.concatenate %374, %375 in 2 : vector<3x16x1xf32>, vector<3x16x127xf32> -> vector<3x16x128xf32>
    %377 = arith.select %11, %33, %376 : vector<3x16x128xi1>, vector<3x16x128xf32>
    %378 = arith.subf %1, %377 : vector<3x16x128xf32>
    %379 = vector.extract_strided_slice %39 {offsets = [0, 0, 127], sizes = [3, 16, 1], strides = [1, 1, 1]} : vector<3x16x128xf32> to vector<3x16x1xf32>
    %380 = vector.extract_strided_slice %39 {offsets = [0, 0, 0], sizes = [3, 16, 127], strides = [1, 1, 1]} : vector<3x16x128xf32> to vector<3x16x127xf32>
    %381 = tpu.concatenate %379, %380 in 2 : vector<3x16x1xf32>, vector<3x16x127xf32> -> vector<3x16x128xf32>
    %382 = arith.select %11, %39, %381 : vector<3x16x128xi1>, vector<3x16x128xf32>
    %383 = arith.subf %2, %382 : vector<3x16x128xf32>
    %384 = arith.mulf %378, %378 : vector<3x16x128xf32>
    %cst_78 = arith.constant dense<0.000000e+00> : vector<16x128xf32>
    %385 = vector.multi_reduction <add>, %384, %cst_78 [0] : vector<3x16x128xf32> to vector<16x128xf32>
    %386 = vector.shape_cast %385 : vector<16x128xf32> to vector<1x16x128xf32>
    %cst_79 = arith.constant 9.99999971E-10 : f32
    %387 = vector.broadcast %cst_79 : f32 to vector<1x16x128xf32>
    %388 = arith.addf %386, %387 : vector<1x16x128xf32>
    %389 = math.rsqrt %388 : vector<1x16x128xf32>
    %390 = vector.broadcast %389 : vector<1x16x128xf32> to vector<3x16x128xf32>
    %391 = arith.mulf %378, %390 : vector<3x16x128xf32>
    %392 = arith.mulf %383, %391 : vector<3x16x128xf32>
    %cst_80 = arith.constant dense<0.000000e+00> : vector<16x128xf32>
    %393 = vector.multi_reduction <add>, %392, %cst_80 [0] : vector<3x16x128xf32> to vector<16x128xf32>
    %394 = vector.shape_cast %393 : vector<16x128xf32> to vector<1x16x128xf32>
    %cst_81 = arith.constant 0.0731735527 : f32
    %395 = vector.broadcast %cst_81 : f32 to vector<1x16x128xf32>
    %396 = arith.mulf %395, %394 : vector<1x16x128xf32>
    %cst_82 = arith.constant 3.12207174 : f32
    %397 = vector.broadcast %cst_82 : f32 to vector<1x16x128xf32>
    %398 = arith.subf %397, %396 : vector<1x16x128xf32>
    %399 = vector.broadcast %398 : vector<1x16x128xf32> to vector<3x16x128xf32>
    %400 = arith.mulf %391, %399 : vector<3x16x128xf32>
    %cst_83 = arith.constant 282.577667 : f32
    %401 = vector.broadcast %cst_83 : f32 to vector<3x16x128xf32>
    %402 = arith.mulf %401, %378 : vector<3x16x128xf32>
    %403 = arith.subf %400, %402 : vector<3x16x128xf32>
    %404 = arith.addf %373, %403 : vector<3x16x128xf32>
    %405 = vector.extract_strided_slice %404 {offsets = [0, 0, 0], sizes = [1, 16, 128], strides = [1, 1, 1]} : vector<3x16x128xf32> to vector<1x16x128xf32>
    %406 = vector.shape_cast %405 : vector<1x16x128xf32> to vector<16x128xf32>
    %c0_84 = arith.constant 0 : index
    %c0_85 = arith.constant 0 : index
    %c0_86 = arith.constant 0 : index
    %407 = vector.load %arg3[%c0_84, %c0_85, %c0_86] : memref<3x16x128xf32, #tpu.memory_space<vmem>>, vector<1x16x128xf32>
    %408 = vector.shape_cast %407 : vector<1x16x128xf32> to vector<16x128xf32>
    %409 = vector.shape_cast %406 : vector<16x128xf32> to vector<1x16x128xf32>
    tpu.vector_store %arg3[%c0_84, %c0_85, %c0_86], %409 {strides = array<i32>} : memref<3x16x128xf32, #tpu.memory_space<vmem>>, vector<1x16x128xf32>,
    %410 = vector.extract_strided_slice %404 {offsets = [1, 0, 0], sizes = [1, 16, 128], strides = [1, 1, 1]} : vector<3x16x128xf32> to vector<1x16x128xf32>
    %411 = vector.shape_cast %410 : vector<1x16x128xf32> to vector<16x128xf32>
    %cst_87 = arith.constant -0.00305963028 : f32
    %412 = vector.broadcast %cst_87 : f32 to vector<16x128xf32>
    %413 = arith.addf %411, %412 : vector<16x128xf32>
    %c1 = arith.constant 1 : index
    %c0_88 = arith.constant 0 : index
    %c0_89 = arith.constant 0 : index
    %414 = vector.load %arg3[%c1, %c0_88, %c0_89] : memref<3x16x128xf32, #tpu.memory_space<vmem>>, vector<1x16x128xf32>
    %415 = vector.shape_cast %414 : vector<1x16x128xf32> to vector<16x128xf32>
    %416 = vector.shape_cast %413 : vector<16x128xf32> to vector<1x16x128xf32>
    tpu.vector_store %arg3[%c1, %c0_88, %c0_89], %416 {strides = array<i32>} : memref<3x16x128xf32, #tpu.memory_space<vmem>>, vector<1x16x128xf32>,
    %417 = vector.extract_strided_slice %404 {offsets = [2, 0, 0], sizes = [1, 16, 128], strides = [1, 1, 1]} : vector<3x16x128xf32> to vector<1x16x128xf32>
    %418 = vector.shape_cast %417 : vector<1x16x128xf32> to vector<16x128xf32>
    %c2 = arith.constant 2 : index
    %c0_90 = arith.constant 0 : index
    %c0_91 = arith.constant 0 : index
    %419 = vector.load %arg3[%c2, %c0_90, %c0_91] : memref<3x16x128xf32, #tpu.memory_space<vmem>>, vector<1x16x128xf32>
    %420 = vector.shape_cast %419 : vector<1x16x128xf32> to vector<16x128xf32>
    %421 = vector.shape_cast %418 : vector<16x128xf32> to vector<1x16x128xf32>
    tpu.vector_store %arg3[%c2, %c0_90, %c0_91], %421 {strides = array<i32>} : memref<3x16x128xf32, #tpu.memory_space<vmem>>, vector<1x16x128xf32>,
    return
  }
  func.func @transform_0(%arg0: i32) -> (i32, i32, i32) {
    %c0_i32 = arith.constant 0 : i32
    %c0_i32_0 = arith.constant 0 : i32
    %c0_i32_1 = arith.constant 0 : i32
    return %c0_i32, %c0_i32_0, %arg0 : i32, i32, i32
  }
  func.func @transform_1(%arg0: i32) -> (i32, i32) {
    %c0_i32 = arith.constant 0 : i32
    %c0_i32_0 = arith.constant 0 : i32
    return %c0_i32, %arg0 : i32, i32
  }
  func.func @transform_2(%arg0: i32) -> (i32, i32, i32) {
    %c0_i32 = arith.constant 0 : i32
    %c0_i32_0 = arith.constant 0 : i32
    %c0_i32_1 = arith.constant 0 : i32
    return %c0_i32, %c0_i32_0, %arg0 : i32, i32, i32
  }
}

</mosaic_0001>

<llo_original>
// kernel: tpu_custom_call.1
$region0: #{tpu_custom_call.1}
  #allocation0 [shape = 'u32[]', space=smem, size = 0x4, offset = 0x4, fixed_abs, tag = 'smem constant byte address 0x4 - core index']
  #allocation1 [shape = 'u32[144,128]{1,0:T(1,128)}', space=vmem, size = 0x12000, scoped, tag = 'internal scratch']
  %s0 = inlined_call_operand.hbm [shape: f32[3,8,128], index: 0, kind: input, shape index: {}]
  %s1 = inlined_call_operand.hbm [shape: f32[3,8,128], index: 1, kind: output, shape index: {}]
  %s2 = sld [smem:[#allocation0]]
  $region18: #{tpu_custom_call.1} parent=0
    _
  %s4 = ssub.s32 1, %s2
  %s5 = scalar_select 0, %s4, %s2
  $region1: #{tpu_custom_call.1} parent=0
    #allocation2 [shape = 'u8[12288]{0}', space=vmem, size = 0x3000, scoped, tag = 'input window, operand 0, single buffered']
    #allocation3 [shape = 's32[1]{0}', space=sflag, size = 0x4, scoped, tag = 'scoped memory for tpu_custom_call.1']
    #allocation4 [shape = 's32[1]{0}', space=sflag, size = 0x4, scoped, tag = 'scoped memory for tpu_custom_call.1']
    #allocation5 [shape = 'u8[12288]{0}', space=vmem, size = 0x3000, scoped, tag = 'output window, operand 0, single buffered']
    %6 = vsyncpa [#allocation3], 0
    %7 = vsyncpa [#allocation4], 0
    // Predicated region
    $region2: #{tpu_custom_call.1} parent=1 // pred_check
      _
    $region3: #{tpu_custom_call.1} parent=1 // pred_check_branch
      %9 = sbr.rel (0) target = $region5
    $region4: #{tpu_custom_call.1} parent=1 // pred_region
      %s11 = ssub.s32 384, 384
      %12 = vsyncadd [#allocation3], %s11
      %s13 = sshll.u32 [#allocation2], 4
      %s14 = int_to_ptr.vmem [resolvable:$true] %s13
      %19 = dma.hbm_to_vmem [thread:$0]  %s0, 384, %s14, [#allocation3], 128, 128, 8
    $region5: #{tpu_custom_call.1} parent=1 // pred_fallthru
      _
    // Predicated region
    $region6: #{tpu_custom_call.1} parent=1 // pred_check
      _
    $region7: #{tpu_custom_call.1} parent=1 // pred_check_branch
      %21 = sbr.rel (0) target = $region9
    $region8: #{tpu_custom_call.1} parent=1 // pred_region
      %22 = dma.done [#allocation3], 384
    $region9: #{tpu_custom_call.1} parent=1 // pred_fallthru
      _
    %v23 = vld [vmem:[#allocation2] sm:$0xff]
    %v24 = vld [vmem:[#allocation2 + $0x8] sm:$0xff]
    %v25 = vld [vmem:[#allocation2 + $0x10] sm:$0xff]
    %v26 = vrot.slane %v23, 7
    %v27 = vrot.slane %v24, 7
    %v28 = vrot.slane %v25, 7
    %29 = vrot.lane.b32.xlu0 %v26, 1
    %v30 = vpop.permute.xlu0 %29
    %31 = vrot.lane.b32.xlu0 %v27, 1
    %v32 = vpop.permute.xlu0 %31
    %33 = vrot.lane.b32.xlu0 %v28, 1
    %v34 = vpop.permute.xlu0 %33
    %35 = vst [vmem:[#allocation5] sm:$0xff] %v30
    %36 = vst [vmem:[#allocation5 + $0x8] sm:$0xff] %v32
    %37 = vst [vmem:[#allocation5 + $0x10] sm:$0xff] %v34
    // Predicated region
    $region10: #{tpu_custom_call.1} parent=1 // pred_check
      _
    $region11: #{tpu_custom_call.1} parent=1 // pred_check_branch
      %39 = sbr.rel (0) target = $region13
    $region12: #{tpu_custom_call.1} parent=1 // pred_region
      %s41 = ssub.s32 384, 384
      %42 = vsyncadd [#allocation4], %s41
      %s43 = sshll.u32 [#allocation5], 4
      %s44 = int_to_ptr.vmem [resolvable:$true] %s43
      %49 = dma.vmem_to_hbm [thread:$0]  %s44, 384, %s1, [#allocation4], 128, 128, 8
    $region13: #{tpu_custom_call.1} parent=1 // pred_fallthru
      _
    // Predicated region
    $region14: #{tpu_custom_call.1} parent=1 // pred_check
      _
    $region15: #{tpu_custom_call.1} parent=1 // pred_check_branch
      %51 = sbr.rel (0) target = $region17
    $region16: #{tpu_custom_call.1} parent=1 // pred_region
      %52 = dma.done [#allocation4], 384
    $region17: #{tpu_custom_call.1} parent=1 // pred_fallthru
      _
    %53 = vsyncpa [#allocation3], 1
    %54 = vsyncpa [#allocation4], 1

// kernel: tpu_custom_call.1
$region0: #{tpu_custom_call.1}
  #allocation0 [shape = 'u32[]', space=smem, size = 0x4, offset = 0x4, fixed_abs, tag = 'smem constant byte address 0x4 - core index']
  #allocation1 [shape = 'u32[144,128]{1,0:T(1,128)}', space=vmem, size = 0x12000, scoped, tag = 'internal scratch']
  %s0 = inlined_call_operand.hbm [shape: f32[6,16,256], index: 0, kind: input, shape index: {}]
  %s1 = inlined_call_operand.vmem [shape: s32[1,256], index: 1, kind: input, shape index: {}]
  %s2 = inlined_call_operand.hbm [shape: f32[3,16,256], index: 2, kind: output, shape index: {}]
  %s3 = sld [smem:[#allocation0]]
  $region45: #{tpu_custom_call.1} parent=0
    _
  %s5 = ssub.s32 1, %s3
  %s6 = scalar_select 0, %s5, %s3
  $region1: #{tpu_custom_call.1} parent=0
    #allocation2 [shape = 'u8[98304]{0}', space=vmem, size = 0x18000, scoped, tag = 'input window, operand 0']
    #allocation3 [shape = 's32[2]{0}', space=sflag, size = 0x8, scoped, tag = 'scoped memory for tpu_custom_call.1']
    #allocation4 [shape = 's32[2]{0}', space=sflag, size = 0x8, scoped, tag = 'scoped memory for tpu_custom_call.1']
    #allocation5 [shape = 'u8[49152]{0}', space=vmem, size = 0xc000, scoped, tag = 'output window, operand 0']
    %7 = vsyncpa [#allocation3], 0
    %s8 = scalar_lea.sflag [#allocation3], 1
    %9 = vsyncpa %s8, 0
    %10 = vsyncpa [#allocation4], 0
    %s11 = scalar_lea.sflag [#allocation4], 1
    %12 = vsyncpa %s11, 0
    loop: start=0, step=1, limit=4
    $region2: #{tpu_custom_call.1} parent=1 // loop_pre_header
      _
    $region3: #{tpu_custom_call.1} parent=1 // loop_header
      %s14 = sphi 0, %s18
      %p15 = scmp.ge.s32.totalorder %s14, 4
      %s24 = sphi 0, %s26
      %s27 = sphi 0, %s24
      %s28 = sphi 0, %s27
      %s44 = sphi 0, %s28
      %s50 = sphi 0, %s52
      %s53 = sphi 0, %s50
      %s54 = sphi 0, %s53
      %s70 = sphi 0, %s54
      %s76 = sphi 0, %s78
      %s79 = sphi 0, %s76
      %s80 = sphi 0, %s79
      %s96 = sphi 0, %s80
    $region4: #{tpu_custom_call.1} parent=1 // loop_header_branch
      %17 = sbr.rel (%p15) target = $region8
    $region5: #{tpu_custom_call.1} parent=1 // loop_body
      %s19 = ssub.s32 %s14, 1
      %s20 = ssub.s32 %s14, 2
      %s21 = sadd.s32 %s14, 1
      %s22 = ssub.s32 %s14, %s21
      %p23 = scmp.eq.s32.totalorder %s22, 0
      %s25 = sadd.s32 %s24, 1
      %s26 = scalar_select %p23, %s24, %s25
      %p29 = pneg %p23
      %p30 = scmp.eq.s32.totalorder %s14, 1
      %p31 = por %p29, %p30
      %p32 = scmp.ne.s32.totalorder %s24, %s27
      %p33 = scmp.eq.s32.totalorder %s14, 0
      %p34 = por %p32, %p33
      %p35 = scmp.ne.s32.totalorder %s24, %s27
      %p36 = scmp.eq.s32.totalorder %s19, 1
      %p37 = por %p35, %p36
      %p38 = scmp.ne.s32.totalorder %s27, %s28
      %p39 = scmp.eq.s32.totalorder %s19, 0
      %p40 = por %p38, %p39
      %p41 = scmp.ne.s32.totalorder %s27, %s28
      %p42 = scmp.eq.s32.totalorder %s20, 1
      %p43 = por %p41, %p42
      %p45 = scmp.ne.s32.totalorder %s28, %s44
      %p46 = scmp.eq.s32.totalorder %s20, 0
      %p47 = por %p45, %p46
      %s48 = ssub.s32 %s14, %s21
      %p49 = scmp.eq.s32.totalorder %s48, 0
      %s51 = sadd.s32 %s50, 1
      %s52 = scalar_select %p49, %s50, %s51
      %p55 = pneg %p49
      %p56 = scmp.eq.s32.totalorder %s14, 1
      %p57 = por %p55, %p56
      %p58 = scmp.ne.s32.totalorder %s50, %s53
      %p59 = scmp.eq.s32.totalorder %s14, 0
      %p60 = por %p58, %p59
      %p61 = scmp.ne.s32.totalorder %s50, %s53
      %p62 = scmp.eq.s32.totalorder %s19, 1
      %p63 = por %p61, %p62
      %p64 = scmp.ne.s32.totalorder %s53, %s54
      %p65 = scmp.eq.s32.totalorder %s19, 0
      %p66 = por %p64, %p65
      %p67 = scmp.ne.s32.totalorder %s53, %s54
      %p68 = scmp.eq.s32.totalorder %s20, 1
      %p69 = por %p67, %p68
      %p71 = scmp.ne.s32.totalorder %s54, %s70
      %p72 = scmp.eq.s32.totalorder %s20, 0
      %p73 = por %p71, %p72
      %s74 = ssub.s32 %s14, %s21
      %p75 = scmp.eq.s32.totalorder %s74, 0
      %s77 = sadd.s32 %s76, 1
      %s78 = scalar_select %p75, %s76, %s77
      %p81 = pneg %p75
      %p82 = scmp.eq.s32.totalorder %s14, 1
      %p83 = por %p81, %p82
      %p84 = scmp.ne.s32.totalorder %s76, %s79
      %p85 = scmp.eq.s32.totalorder %s14, 0
      %p86 = por %p84, %p85
      %p87 = scmp.ne.s32.totalorder %s76, %s79
      %p88 = scmp.eq.s32.totalorder %s19, 1
      %p89 = por %p87, %p88
      %p90 = scmp.ne.s32.totalorder %s79, %s80
      %p91 = scmp.eq.s32.totalorder %s19, 0
      %p92 = por %p90, %p91
      %p93 = scmp.ne.s32.totalorder %s79, %s80
      %p94 = scmp.eq.s32.totalorder %s20, 1
      %p95 = por %p93, %p94
      %p97 = scmp.ne.s32.totalorder %s80, %s96
      %p98 = scmp.eq.s32.totalorder %s20, 0
      %p99 = por %p97, %p98
      %p100 = scmp.le.s32.totalorder 1, %s14
      %p101 = scmp.lt.s32.totalorder %s14, 3
      %p102 = pnand %p100, %p101
      %p103 = pneg %p102
      // Predicated region
      $region9: #{tpu_custom_call.1} parent=5 // pred_check
        _
      $region10: #{tpu_custom_call.1} parent=5 // pred_check_branch
        %105 = sbr.rel (%p102) target = $region12
      $region11: #{tpu_custom_call.1} parent=5 // pred_region
        %s106 = ssub.s32 %s14, 1
      $region12: #{tpu_custom_call.1} parent=5 // pred_fallthru
        _
      %p107 = scmp.lt.s32.totalorder %s14, 2
      // Predicated region
      $region13: #{tpu_custom_call.1} parent=5 // pred_check
        %p108 = pneg %p107
      $region14: #{tpu_custom_call.1} parent=5 // pred_check_branch
        %110 = sbr.rel (%p108) target = $region16
      $region15: #{tpu_custom_call.1} parent=5 // pred_region
        // Predicated region
        $region17: #{tpu_custom_call.1} parent=15 // pred_check
          %p111 = pneg %p34
        $region18: #{tpu_custom_call.1} parent=15 // pred_check_branch
          %113 = sbr.rel (%p111) target = $region20
        $region19: #{tpu_custom_call.1} parent=15 // pred_region
          %s114 = sand.u32 %s24, 1
          %s115 = scalar_lea.sflag [#allocation3], %s114
          %s116 = sand.u32 %s24, 1
          %s117 = smul.addr %s116, 96
          %s118 = scalar_lea.vmem [#allocation2], %s117
          %s120 = ssub.s32 1536, 1536
          %121 = vsyncadd %s115, %s120
          %s122 = smul.addr %s14, 128
          %s123 = scalar_lea.hbm %s0, %s122
          %s124 = sshll.u32 %s118, 4
          %s125 = int_to_ptr.vmem [resolvable:$true] %s124
          %130 = dma.hbm_to_vmem [thread:$0]  %s123, 1536, %s125, %s115, 256, 128, 8
        $region20: #{tpu_custom_call.1} parent=15 // pred_fallthru
          _
        // Predicated region
        $region21: #{tpu_custom_call.1} parent=15 // pred_check
          %p131 = pneg %p60
        $region22: #{tpu_custom_call.1} parent=15 // pred_check_branch
          %133 = sbr.rel (%p131) target = $region24
        $region23: #{tpu_custom_call.1} parent=15 // pred_region
          %p134 = scmp.lt.s32.totalorder %s14, 1
          %s135 = scalar_select %p134, %s14, 1
          %s136 = scalar_lea.vmem %s1, %s135
        $region24: #{tpu_custom_call.1} parent=15 // pred_fallthru
          _
      $region16: #{tpu_custom_call.1} parent=5 // pred_fallthru
        _
      %p137 = scmp.le.s32.totalorder 1, %s14
      %p138 = scmp.lt.s32.totalorder %s14, 3
      %p139 = pnand %p137, %p138
      %p140 = pneg %p139
      // Predicated region
      $region25: #{tpu_custom_call.1} parent=5 // pred_check
        _
      $region26: #{tpu_custom_call.1} parent=5 // pred_check_branch
        %142 = sbr.rel (%p139) target = $region28
      $region27: #{tpu_custom_call.1} parent=5 // pred_region
        %s143 = ssub.s32 %s14, 1
        %s144 = sand.u32 %s27, 1
        %s145 = scalar_lea.sflag [#allocation3], %s144
        %s146 = sand.u32 %s27, 1
        %s147 = smul.addr %s146, 96
        %s148 = scalar_lea.vmem [#allocation2], %s147
        // Predicated region
        $region29: #{tpu_custom_call.1} parent=27 // pred_check
          %p149 = pneg %p40
        $region30: #{tpu_custom_call.1} parent=27 // pred_check_branch
          %151 = sbr.rel (%p149) target = $region32
        $region31: #{tpu_custom_call.1} parent=27 // pred_region
          %152 = dma.done %s145, 1536
        $region32: #{tpu_custom_call.1} parent=27 // pred_fallthru
          _
        %s153 = sand.u32 %s27, 1
        %s154 = scalar_lea.sflag [#allocation3], %s153
        %s155 = sand.u32 %s27, 1
        %s156 = smul.addr %s155, 96
        %s157 = scalar_lea.vmem [#allocation2], %s156
        %p158 = pneg %p40
        %p159 = pneg %p37
        %p160 = scmp.lt.s32.totalorder %s19, 1
        %s161 = scalar_select %p160, %s19, 1
        %s162 = scalar_lea.vmem %s1, %s161
        %p163 = pneg %p66
        %p164 = pneg %p63
        %p165 = pneg %p92
        %p166 = pneg %p89
        %s167 = sand.u32 %s79, 1
        %s168 = scalar_lea.sflag [#allocation4], %s167
        %s169 = sand.u32 %s79, 1
        %s170 = smul.addr %s169, 48
        %s171 = scalar_lea.vmem [#allocation5], %s170
        %p172 = scmp.lt.s32.totalorder %s19, 1
        %s173 = scalar_select %p172, %s19, 1
        %s174 = scalar_lea.vmem %s1, %s173
        %v175 = vld [vmem:[%s148] sm:$0xff]
        %v176 = vld [vmem:[%s148 + $0x8] sm:$0xff]
        %v177 = vld [vmem:[%s148 + $0x10] sm:$0xff]
        %v178 = vld [vmem:[%s148 + $0x18] sm:$0xff]
        %v179 = vld [vmem:[%s148 + $0x20] sm:$0xff]
        %v180 = vld [vmem:[%s148 + $0x28] sm:$0xff]
        %v181 = vld [vmem:[%s148 + $0x30] sm:$0xff]
        %v182 = vld [vmem:[%s148 + $0x38] sm:$0xff]
        %v183 = vld [vmem:[%s148 + $0x40] sm:$0xff]
        %v184 = vld [vmem:[%s148 + $0x48] sm:$0xff]
        %v185 = vld [vmem:[%s148 + $0x50] sm:$0xff]
        %v186 = vld [vmem:[%s148 + $0x58] sm:$0xff]
        %v187 = vlaneseq
        %v188 = vshrl.u32 %v187, 7
        %v189 = vadd.s32 %v188, 8
        %v190 = vld [vmem:[%s174] sm:$0x1]
        %v191 = vlaneseq
        %v192 = vshrl.u32 %v191, 7
        %v193 = vsub.s32 0, %v192
        %v194 = vrot.slane %v190, %v193
        %vm195 = vcmp.lt.s32.totalorder %v194, 2
        %vm196 = vcmp.lt.s32.totalorder %v194, 1
        %vm197 = vcmp.ge.s32.totalorder %v194, 15
        %vm198 = vcmp.ge.s32.totalorder %v194, 14
        %vm199 = vcmp.lt.s32.totalorder %v188, 2
        %vm200 = vcmp.lt.s32.totalorder %v189, 2
        %v204 = vrot.slane %v176, 6
        %v205 = vrot.slane %v178, 6
        %v206 = vrot.slane %v180, 6
        %vm213 = vcmask 1041408
        %v214 = vrot.slane %v175, 6
        %v215 = vsel %vm213, %v214, %v204
        %v216 = vrot.slane %v177, 6
        %v217 = vsel %vm213, %v216, %v205
        %v218 = vrot.slane %v179, 6
        %v219 = vsel %vm213, %v218, %v206
        %v226 = vsel %vm213, %v204, %v214
        %v227 = vsel %vm213, %v205, %v216
        %v228 = vsel %vm213, %v206, %v218
        %v229 = vsel %vm199, %v175, %v226
        %v230 = vsel %vm200, %v176, %v215
        %v231 = vsel %vm199, %v177, %v227
        %v232 = vsel %vm200, %v178, %v217
        %v233 = vsel %vm199, %v179, %v228
        %v234 = vsel %vm200, %v180, %v219
        %v238 = vrot.slane %v182, 6
        %v239 = vrot.slane %v184, 6
        %v240 = vrot.slane %v186, 6
        %v247 = vrot.slane %v181, 6
        %v248 = vsel %vm213, %v247, %v238
        %v249 = vrot.slane %v183, 6
        %v250 = vsel %vm213, %v249, %v239
        %v251 = vrot.slane %v185, 6
        %v252 = vsel %vm213, %v251, %v240
        %v259 = vsel %vm213, %v238, %v247
        %v260 = vsel %vm213, %v239, %v249
        %v261 = vsel %vm213, %v240, %v251
        %v262 = vsel %vm199, %v181, %v259
        %v263 = vsel %vm200, %v182, %v248
        %v264 = vsel %vm199, %v183, %v260
        %v265 = vsel %vm200, %v184, %v250
        %v266 = vsel %vm199, %v185, %v261
        %v267 = vsel %vm200, %v186, %v252
        %vm268 = vcmp.lt.s32.totalorder %v188, 1
        %vm269 = vcmp.lt.s32.totalorder %v189, 1
        %v270 = vrot.slane %v176, 7
        %v271 = vrot.slane %v178, 7
        %v272 = vrot.slane %v180, 7
        %vm276 = vcmask 1040384
        %v277 = vrot.slane %v175, 7
        %v278 = vsel %vm276, %v277, %v270
        %v279 = vrot.slane %v177, 7
        %v280 = vsel %vm276, %v279, %v271
        %v281 = vrot.slane %v179, 7
        %v282 = vsel %vm276, %v281, %v272
        %v289 = vsel %vm276, %v270, %v277
        %v290 = vsel %vm276, %v271, %v279
        %v291 = vsel %vm276, %v272, %v281
        %v292 = vsel %vm268, %v175, %v289
        %v293 = vsel %vm269, %v176, %v278
        %v294 = vsel %vm268, %v177, %v290
        %v295 = vsel %vm269, %v178, %v280
        %v296 = vsel %vm268, %v179, %v291
        %v297 = vsel %vm269, %v180, %v282
        %v298 = vrot.slane %v182, 7
        %v299 = vrot.slane %v184, 7
        %v300 = vrot.slane %v186, 7
        %v304 = vrot.slane %v181, 7
        %v305 = vsel %vm276, %v304, %v298
        %v306 = vrot.slane %v183, 7
        %v307 = vsel %vm276, %v306, %v299
        %v308 = vrot.slane %v185, 7
        %v309 = vsel %vm276, %v308, %v300
        %v316 = vsel %vm276, %v298, %v304
        %v317 = vsel %vm276, %v299, %v306
        %v318 = vsel %vm276, %v300, %v308
        %v319 = vsel %vm268, %v181, %v316
        %v320 = vsel %vm269, %v182, %v305
        %v321 = vsel %vm268, %v183, %v317
        %v322 = vsel %vm269, %v184, %v307
        %v323 = vsel %vm268, %v185, %v318
        %v324 = vsel %vm269, %v186, %v309
        %vm325 = vcmp.ge.s32.totalorder %v188, 15
        %vm326 = vcmp.ge.s32.totalorder %v189, 15
        %vm327 = vcmask 1046528
        %v328 = vrot.slane %v175, 1
        %v329 = vrot.slane %v176, 1
        %v330 = vsel %vm327, %v328, %v329
        %v331 = vrot.slane %v177, 1
        %v332 = vrot.slane %v178, 1
        %v333 = vsel %vm327, %v331, %v332
        %v334 = vrot.slane %v179, 1
        %v335 = vrot.slane %v180, 1
        %v336 = vsel %vm327, %v334, %v335
        %v346 = vsel %vm327, %v329, %v328
        %v347 = vsel %vm327, %v332, %v331
        %v348 = vsel %vm327, %v335, %v334
        %v349 = vsel %vm325, %v175, %v330
        %v350 = vsel %vm326, %v176, %v346
        %v351 = vsel %vm325, %v177, %v333
        %v352 = vsel %vm326, %v178, %v347
        %v353 = vsel %vm325, %v179, %v336
        %v354 = vsel %vm326, %v180, %v348
        %v355 = vrot.slane %v181, 1
        %v356 = vrot.slane %v182, 1
        %v357 = vsel %vm327, %v355, %v356
        %v358 = vrot.slane %v183, 1
        %v359 = vrot.slane %v184, 1
        %v360 = vsel %vm327, %v358, %v359
        %v361 = vrot.slane %v185, 1
        %v362 = vrot.slane %v186, 1
        %v363 = vsel %vm327, %v361, %v362
        %v373 = vsel %vm327, %v356, %v355
        %v374 = vsel %vm327, %v359, %v358
        %v375 = vsel %vm327, %v362, %v361
        %v376 = vsel %vm325, %v181, %v357
        %v377 = vsel %vm326, %v182, %v373
        %v378 = vsel %vm325, %v183, %v360
        %v379 = vsel %vm326, %v184, %v374
        %v380 = vsel %vm325, %v185, %v363
        %v381 = vsel %vm326, %v186, %v375
        %vm382 = vcmp.ge.s32.totalorder %v188, 14
        %vm383 = vcmp.ge.s32.totalorder %v189, 14
        %vm384 = vcmask 1045504
        %v385 = vrot.slane %v175, 2
        %v386 = vrot.slane %v176, 2
        %v387 = vsel %vm384, %v385, %v386
        %v388 = vrot.slane %v177, 2
        %v389 = vrot.slane %v178, 2
        %v390 = vsel %vm384, %v388, %v389
        %v391 = vrot.slane %v179, 2
        %v392 = vrot.slane %v180, 2
        %v393 = vsel %vm384, %v391, %v392
        %v403 = vsel %vm384, %v386, %v385
        %v404 = vsel %vm384, %v389, %v388
        %v405 = vsel %vm384, %v392, %v391
        %v406 = vsel %vm382, %v175, %v387
        %v407 = vsel %vm383, %v176, %v403
        %v408 = vsel %vm382, %v177, %v390
        %v409 = vsel %vm383, %v178, %v404
        %v410 = vsel %vm382, %v179, %v393
        %v411 = vsel %vm383, %v180, %v405
        %v412 = vrot.slane %v181, 2
        %v413 = vrot.slane %v182, 2
        %v414 = vsel %vm384, %v412, %v413
        %v415 = vrot.slane %v183, 2
        %v416 = vrot.slane %v184, 2
        %v417 = vsel %vm384, %v415, %v416
        %v418 = vrot.slane %v185, 2
        %v419 = vrot.slane %v186, 2
        %v420 = vsel %vm384, %v418, %v419
        %v430 = vsel %vm384, %v413, %v412
        %v431 = vsel %vm384, %v416, %v415
        %v432 = vsel %vm384, %v419, %v418
        %v433 = vsel %vm382, %v181, %v414
        %v434 = vsel %vm383, %v182, %v430
        %v435 = vsel %vm382, %v183, %v417
        %v436 = vsel %vm383, %v184, %v431
        %v437 = vsel %vm382, %v185, %v420
        %v438 = vsel %vm383, %v186, %v432
        %v439 = vsub.f32 %v175, %v229
        %v440 = vsub.f32 %v176, %v230
        %v441 = vsub.f32 %v177, %v231
        %v442 = vsub.f32 %v178, %v232
        %v443 = vsub.f32 %v179, %v233
        %v444 = vsub.f32 %v180, %v234
        %v445 = vsub.f32 %v181, %v262
        %v446 = vsub.f32 %v182, %v263
        %v447 = vsub.f32 %v183, %v264
        %v448 = vsub.f32 %v184, %v265
        %v449 = vsub.f32 %v185, %v266
        %v450 = vsub.f32 %v186, %v267
        %v451 = vmul.f32 %v439, %v439
        %v452 = vmul.f32 %v440, %v440
        %v453 = vmul.f32 %v441, %v441
        %v454 = vmul.f32 %v442, %v442
        %v455 = vmul.f32 %v443, %v443
        %v456 = vmul.f32 %v444, %v444
        %v457 = vadd.f32 %v451, %v453
        %v458 = vadd.f32 %v457, %v455
        %v459 = vadd.f32 %v452, %v454
        %v460 = vadd.f32 %v459, %v456
        %v461 = vadd.f32 %v458, 1e-09
        %v462 = vadd.f32 %v460, 1e-09
        %v463 = vrsqrt.pop %v461
        %v464 = vrsqrt.pop %v462
        %v465 = vmul.f32 %v439, %v463
        %v466 = vmul.f32 %v440, %v464
        %v467 = vmul.f32 %v441, %v463
        %v468 = vmul.f32 %v442, %v464
        %v469 = vmul.f32 %v443, %v463
        %v470 = vmul.f32 %v444, %v464
        %v471 = vmul.f32 %v445, %v465
        %v472 = vmul.f32 %v446, %v466
        %v473 = vmul.f32 %v447, %v467
        %v474 = vmul.f32 %v448, %v468
        %v475 = vmul.f32 %v449, %v469
        %v476 = vmul.f32 %v450, %v470
        %v477 = vadd.f32 %v471, %v473
        %v478 = vadd.f32 %v477, %v475
        %v479 = vadd.f32 %v472, %v474
        %v480 = vadd.f32 %v479, %v476
        %v481 = vmul.f32 %v478, 0.07317355
        %v482 = vmul.f32 %v480, 0.07317355
        %v483 = vsub.f32 3.1220717, %v481
        %v484 = vsub.f32 3.1220717, %v482
        %v485 = vmul.f32 %v465, %v483
        %v486 = vmul.f32 %v466, %v484
        %v487 = vmul.f32 %v467, %v483
        %v488 = vmul.f32 %v468, %v484
        %v489 = vmul.f32 %v469, %v483
        %v490 = vmul.f32 %v470, %v484
        %v491 = vmul.f32 %v439, 199.81259
        %v492 = vmul.f32 %v440, 199.81259
        %v493 = vmul.f32 %v441, 199.81259
        %v494 = vmul.f32 %v442, 199.81259
        %v495 = vmul.f32 %v443, 199.81259
        %v496 = vmul.f32 %v444, 199.81259
        %v497 = vsub.f32 %v485, %v491
        %v498 = vsub.f32 %v486, %v492
        %v499 = vsub.f32 %v487, %v493
        %v500 = vsub.f32 %v488, %v494
        %v501 = vsub.f32 %v489, %v495
        %v502 = vsub.f32 %v490, %v496
        %v503 = vadd.f32 %v497, 0.0
        %v504 = vadd.f32 %v498, 0.0
        %v505 = vadd.f32 %v499, 0.0
        %v506 = vadd.f32 %v500, 0.0
        %v507 = vadd.f32 %v501, 0.0
        %v508 = vadd.f32 %v502, 0.0
        %509 = vrot.lane.b32.xlu0 %v175, 126
        %v510 = vpop.permute.xlu0 %509
        %511 = vrot.lane.b32.xlu0 %v176, 126
        %v512 = vpop.permute.xlu0 %511
        %513 = vrot.lane.b32.xlu0 %v177, 126
        %v514 = vpop.permute.xlu0 %513
        %515 = vrot.lane.b32.xlu0 %v178, 126
        %v516 = vpop.permute.xlu0 %515
        %517 = vrot.lane.b32.xlu0 %v179, 126
        %v518 = vpop.permute.xlu0 %517
        %519 = vrot.lane.b32.xlu0 %v180, 126
        %v520 = vpop.permute.xlu0 %519
        %v527 = vsel %vm198, %v175, %v510
        %v528 = vsel %vm198, %v176, %v512
        %v529 = vsel %vm198, %v177, %v514
        %v530 = vsel %vm198, %v178, %v516
        %v531 = vsel %vm198, %v179, %v518
        %v532 = vsel %vm198, %v180, %v520
        %v533 = vsub.f32 %v175, %v527
        %v534 = vsub.f32 %v176, %v528
        %v535 = vsub.f32 %v177, %v529
        %v536 = vsub.f32 %v178, %v530
        %v537 = vsub.f32 %v179, %v531
        %v538 = vsub.f32 %v180, %v532
        %539 = vrot.lane.b32.xlu0 %v181, 126
        %v540 = vpop.permute.xlu0 %539
        %541 = vrot.lane.b32.xlu0 %v182, 126
        %v542 = vpop.permute.xlu0 %541
        %543 = vrot.lane.b32.xlu0 %v183, 126
        %v544 = vpop.permute.xlu0 %543
        %545 = vrot.lane.b32.xlu0 %v184, 126
        %v546 = vpop.permute.xlu0 %545
        %547 = vrot.lane.b32.xlu0 %v185, 126
        %v548 = vpop.permute.xlu0 %547
        %549 = vrot.lane.b32.xlu0 %v186, 126
        %v550 = vpop.permute.xlu0 %549
        %v557 = vsel %vm198, %v181, %v540
        %v558 = vsel %vm198, %v182, %v542
        %v559 = vsel %vm198, %v183, %v544
        %v560 = vsel %vm198, %v184, %v546
        %v561 = vsel %vm198, %v185, %v548
        %v562 = vsel %vm198, %v186, %v550
        %v563 = vsub.f32 %v181, %v557
        %v564 = vsub.f32 %v182, %v558
        %v565 = vsub.f32 %v183, %v559
        %v566 = vsub.f32 %v184, %v560
        %v567 = vsub.f32 %v185, %v561
        %v568 = vsub.f32 %v186, %v562
        %v569 = vmul.f32 %v533, %v533
        %v570 = vmul.f32 %v534, %v534
        %v571 = vmul.f32 %v535, %v535
        %v572 = vmul.f32 %v536, %v536
        %v573 = vmul.f32 %v537, %v537
        %v574 = vmul.f32 %v538, %v538
        %v575 = vadd.f32 %v569, %v571
        %v576 = vadd.f32 %v575, %v573
        %v577 = vadd.f32 %v570, %v572
        %v578 = vadd.f32 %v577, %v574
        %v579 = vadd.f32 %v576, 1e-09
        %v580 = vadd.f32 %v578, 1e-09
        %v581 = vrsqrt.pop %v579
        %v582 = vrsqrt.pop %v580
        %v583 = vmul.f32 %v533, %v581
        %v584 = vmul.f32 %v534, %v582
        %v585 = vmul.f32 %v535, %v581
        %v586 = vmul.f32 %v536, %v582
        %v587 = vmul.f32 %v537, %v581
        %v588 = vmul.f32 %v538, %v582
        %v589 = vmul.f32 %v563, %v583
        %v590 = vmul.f32 %v564, %v584
        %v591 = vmul.f32 %v565, %v585
        %v592 = vmul.f32 %v566, %v586
        %v593 = vmul.f32 %v567, %v587
        %v594 = vmul.f32 %v568, %v588
        %v595 = vadd.f32 %v589, %v591
        %v596 = vadd.f32 %v595, %v593
        %v597 = vadd.f32 %v590, %v592
        %v598 = vadd.f32 %v597, %v594
        %v599 = vmul.f32 %v596, 0.07317355
        %v600 = vmul.f32 %v598, 0.07317355
        %v601 = vsub.f32 3.1220717, %v599
        %v602 = vsub.f32 3.1220717, %v600
        %v603 = vmul.f32 %v583, %v601
        %v604 = vmul.f32 %v584, %v602
        %v605 = vmul.f32 %v585, %v601
        %v606 = vmul.f32 %v586, %v602
        %v607 = vmul.f32 %v587, %v601
        %v608 = vmul.f32 %v588, %v602
        %v609 = vmul.f32 %v533, 199.81259
        %v610 = vmul.f32 %v534, 199.81259
        %v611 = vmul.f32 %v535, 199.81259
        %v612 = vmul.f32 %v536, 199.81259
        %v613 = vmul.f32 %v537, 199.81259
        %v614 = vmul.f32 %v538, 199.81259
        %v615 = vsub.f32 %v603, %v609
        %v616 = vsub.f32 %v604, %v610
        %v617 = vsub.f32 %v605, %v611
        %v618 = vsub.f32 %v606, %v612
        %v619 = vsub.f32 %v607, %v613
        %v620 = vsub.f32 %v608, %v614
        %v621 = vadd.f32 %v503, %v615
        %v622 = vadd.f32 %v504, %v616
        %v623 = vadd.f32 %v505, %v617
        %v624 = vadd.f32 %v506, %v618
        %v625 = vadd.f32 %v507, %v619
        %v626 = vadd.f32 %v508, %v620
        %v627 = vsub.f32 %v175, %v406
        %v628 = vsub.f32 %v176, %v407
        %v629 = vsub.f32 %v177, %v408
        %v630 = vsub.f32 %v178, %v409
        %v631 = vsub.f32 %v179, %v410
        %v632 = vsub.f32 %v180, %v411
        %v633 = vsub.f32 %v181, %v433
        %v634 = vsub.f32 %v182, %v434
        %v635 = vsub.f32 %v183, %v435
        %v636 = vsub.f32 %v184, %v436
        %v637 = vsub.f32 %v185, %v437
        %v638 = vsub.f32 %v186, %v438
        %v639 = vmul.f32 %v627, %v627
        %v640 = vmul.f32 %v628, %v628
        %v641 = vmul.f32 %v629, %v629
        %v642 = vmul.f32 %v630, %v630
        %v643 = vmul.f32 %v631, %v631
        %v644 = vmul.f32 %v632, %v632
        %v645 = vadd.f32 %v639, %v641
        %v646 = vadd.f32 %v645, %v643
        %v647 = vadd.f32 %v640, %v642
        %v648 = vadd.f32 %v647, %v644
        %v649 = vadd.f32 %v646, 1e-09
        %v650 = vadd.f32 %v648, 1e-09
        %v651 = vrsqrt.pop %v649
        %v652 = vrsqrt.pop %v650
        %v653 = vmul.f32 %v627, %v651
        %v654 = vmul.f32 %v628, %v652
        %v655 = vmul.f32 %v629, %v651
        %v656 = vmul.f32 %v630, %v652
        %v657 = vmul.f32 %v631, %v651
        %v658 = vmul.f32 %v632, %v652
        %v659 = vmul.f32 %v633, %v653
        %v660 = vmul.f32 %v634, %v654
        %v661 = vmul.f32 %v635, %v655
        %v662 = vmul.f32 %v636, %v656
        %v663 = vmul.f32 %v637, %v657
        %v664 = vmul.f32 %v638, %v658
        %v665 = vadd.f32 %v659, %v661
        %v666 = vadd.f32 %v665, %v663
        %v667 = vadd.f32 %v660, %v662
        %v668 = vadd.f32 %v667, %v664
        %v669 = vmul.f32 %v666, 0.07317355
        %v670 = vmul.f32 %v668, 0.07317355
        %v671 = vsub.f32 3.1220717, %v669
        %v672 = vsub.f32 3.1220717, %v670
        %v673 = vmul.f32 %v653, %v671
        %v674 = vmul.f32 %v654, %v672
        %v675 = vmul.f32 %v655, %v671
        %v676 = vmul.f32 %v656, %v672
        %v677 = vmul.f32 %v657, %v671
        %v678 = vmul.f32 %v658, %v672
        %v679 = vmul.f32 %v627, 199.81259
        %v680 = vmul.f32 %v628, 199.81259
        %v681 = vmul.f32 %v629, 199.81259
        %v682 = vmul.f32 %v630, 199.81259
        %v683 = vmul.f32 %v631, 199.81259
        %v684 = vmul.f32 %v632, 199.81259
        %v685 = vsub.f32 %v673, %v679
        %v686 = vsub.f32 %v674, %v680
        %v687 = vsub.f32 %v675, %v681
        %v688 = vsub.f32 %v676, %v682
        %v689 = vsub.f32 %v677, %v683
        %v690 = vsub.f32 %v678, %v684
        %v691 = vadd.f32 %v621, %v685
        %v692 = vadd.f32 %v622, %v686
        %v693 = vadd.f32 %v623, %v687
        %v694 = vadd.f32 %v624, %v688
        %v695 = vadd.f32 %v625, %v689
        %v696 = vadd.f32 %v626, %v690
        %697 = vrot.lane.b32.xlu0 %v175, 2
        %v698 = vpop.permute.xlu0 %697
        %699 = vrot.lane.b32.xlu0 %v176, 2
        %v700 = vpop.permute.xlu0 %699
        %701 = vrot.lane.b32.xlu0 %v177, 2
        %v702 = vpop.permute.xlu0 %701
        %703 = vrot.lane.b32.xlu0 %v178, 2
        %v704 = vpop.permute.xlu0 %703
        %705 = vrot.lane.b32.xlu0 %v179, 2
        %v706 = vpop.permute.xlu0 %705
        %707 = vrot.lane.b32.xlu0 %v180, 2
        %v708 = vpop.permute.xlu0 %707
        %v715 = vsel %vm195, %v175, %v698
        %v716 = vsel %vm195, %v176, %v700
        %v717 = vsel %vm195, %v177, %v702
        %v718 = vsel %vm195, %v178, %v704
        %v719 = vsel %vm195, %v179, %v706
        %v720 = vsel %vm195, %v180, %v708
        %v721 = vsub.f32 %v175, %v715
        %v722 = vsub.f32 %v176, %v716
        %v723 = vsub.f32 %v177, %v717
        %v724 = vsub.f32 %v178, %v718
        %v725 = vsub.f32 %v179, %v719
        %v726 = vsub.f32 %v180, %v720
        %727 = vrot.lane.b32.xlu0 %v181, 2
        %v728 = vpop.permute.xlu0 %727
        %729 = vrot.lane.b32.xlu0 %v182, 2
        %v730 = vpop.permute.xlu0 %729
        %731 = vrot.lane.b32.xlu0 %v183, 2
        %v732 = vpop.permute.xlu0 %731
        %733 = vrot.lane.b32.xlu0 %v184, 2
        %v734 = vpop.permute.xlu0 %733
        %735 = vrot.lane.b32.xlu0 %v185, 2
        %v736 = vpop.permute.xlu0 %735
        %737 = vrot.lane.b32.xlu0 %v186, 2
        %v738 = vpop.permute.xlu0 %737
        %v745 = vsel %vm195, %v181, %v728
        %v746 = vsel %vm195, %v182, %v730
        %v747 = vsel %vm195, %v183, %v732
        %v748 = vsel %vm195, %v184, %v734
        %v749 = vsel %vm195, %v185, %v736
        %v750 = vsel %vm195, %v186, %v738
        %v751 = vsub.f32 %v181, %v745
        %v752 = vsub.f32 %v182, %v746
        %v753 = vsub.f32 %v183, %v747
        %v754 = vsub.f32 %v184, %v748
        %v755 = vsub.f32 %v185, %v749
        %v756 = vsub.f32 %v186, %v750
        %v757 = vmul.f32 %v721, %v721
        %v758 = vmul.f32 %v722, %v722
        %v759 = vmul.f32 %v723, %v723
        %v760 = vmul.f32 %v724, %v724
        %v761 = vmul.f32 %v725, %v725
        %v762 = vmul.f32 %v726, %v726
        %v763 = vadd.f32 %v757, %v759
        %v764 = vadd.f32 %v763, %v761
        %v765 = vadd.f32 %v758, %v760
        %v766 = vadd.f32 %v765, %v762
        %v767 = vadd.f32 %v764, 1e-09
        %v768 = vadd.f32 %v766, 1e-09
        %v769 = vrsqrt.pop %v767
        %v770 = vrsqrt.pop %v768
        %v771 = vmul.f32 %v721, %v769
        %v772 = vmul.f32 %v722, %v770
        %v773 = vmul.f32 %v723, %v769
        %v774 = vmul.f32 %v724, %v770
        %v775 = vmul.f32 %v725, %v769
        %v776 = vmul.f32 %v726, %v770
        %v777 = vmul.f32 %v751, %v771
        %v778 = vmul.f32 %v752, %v772
        %v779 = vmul.f32 %v753, %v773
        %v780 = vmul.f32 %v754, %v774
        %v781 = vmul.f32 %v755, %v775
        %v782 = vmul.f32 %v756, %v776
        %v783 = vadd.f32 %v777, %v779
        %v784 = vadd.f32 %v783, %v781
        %v785 = vadd.f32 %v778, %v780
        %v786 = vadd.f32 %v785, %v782
        %v787 = vmul.f32 %v784, 0.07317355
        %v788 = vmul.f32 %v786, 0.07317355
        %v789 = vsub.f32 3.1220717, %v787
        %v790 = vsub.f32 3.1220717, %v788
        %v791 = vmul.f32 %v771, %v789
        %v792 = vmul.f32 %v772, %v790
        %v793 = vmul.f32 %v773, %v789
        %v794 = vmul.f32 %v774, %v790
        %v795 = vmul.f32 %v775, %v789
        %v796 = vmul.f32 %v776, %v790
        %v797 = vmul.f32 %v721, 199.81259
        %v798 = vmul.f32 %v722, 199.81259
        %v799 = vmul.f32 %v723, 199.81259
        %v800 = vmul.f32 %v724, 199.81259
        %v801 = vmul.f32 %v725, 199.81259
        %v802 = vmul.f32 %v726, 199.81259
        %v803 = vsub.f32 %v791, %v797
        %v804 = vsub.f32 %v792, %v798
        %v805 = vsub.f32 %v793, %v799
        %v806 = vsub.f32 %v794, %v800
        %v807 = vsub.f32 %v795, %v801
        %v808 = vsub.f32 %v796, %v802
        %v809 = vadd.f32 %v691, %v803
        %v810 = vadd.f32 %v692, %v804
        %v811 = vadd.f32 %v693, %v805
        %v812 = vadd.f32 %v694, %v806
        %v813 = vadd.f32 %v695, %v807
        %v814 = vadd.f32 %v696, %v808
        %v815 = vsub.f32 %v175, %v292
        %v816 = vsub.f32 %v176, %v293
        %v817 = vsub.f32 %v177, %v294
        %v818 = vsub.f32 %v178, %v295
        %v819 = vsub.f32 %v179, %v296
        %v820 = vsub.f32 %v180, %v297
        %v821 = vsub.f32 %v181, %v319
        %v822 = vsub.f32 %v182, %v320
        %v823 = vsub.f32 %v183, %v321
        %v824 = vsub.f32 %v184, %v322
        %v825 = vsub.f32 %v185, %v323
        %v826 = vsub.f32 %v186, %v324
        %v827 = vmul.f32 %v815, %v815
        %v828 = vmul.f32 %v816, %v816
        %v829 = vmul.f32 %v817, %v817
        %v830 = vmul.f32 %v818, %v818
        %v831 = vmul.f32 %v819, %v819
        %v832 = vmul.f32 %v820, %v820
        %v833 = vadd.f32 %v827, %v829
        %v834 = vadd.f32 %v833, %v831
        %v835 = vadd.f32 %v828, %v830
        %v836 = vadd.f32 %v835, %v832
        %v837 = vadd.f32 %v834, 1e-09
        %v838 = vadd.f32 %v836, 1e-09
        %v839 = vrsqrt.pop %v837
        %v840 = vrsqrt.pop %v838
        %v841 = vmul.f32 %v815, %v839
        %v842 = vmul.f32 %v816, %v840
        %v843 = vmul.f32 %v817, %v839
        %v844 = vmul.f32 %v818, %v840
        %v845 = vmul.f32 %v819, %v839
        %v846 = vmul.f32 %v820, %v840
        %v847 = vmul.f32 %v821, %v841
        %v848 = vmul.f32 %v822, %v842
        %v849 = vmul.f32 %v823, %v843
        %v850 = vmul.f32 %v824, %v844
        %v851 = vmul.f32 %v825, %v845
        %v852 = vmul.f32 %v826, %v846
        %v853 = vadd.f32 %v847, %v849
        %v854 = vadd.f32 %v853, %v851
        %v855 = vadd.f32 %v848, %v850
        %v856 = vadd.f32 %v855, %v852
        %v857 = vmul.f32 %v854, 0.07317355
        %v858 = vmul.f32 %v856, 0.07317355
        %v859 = vsub.f32 3.1220717, %v857
        %v860 = vsub.f32 3.1220717, %v858
        %v861 = vmul.f32 %v841, %v859
        %v862 = vmul.f32 %v842, %v860
        %v863 = vmul.f32 %v843, %v859
        %v864 = vmul.f32 %v844, %v860
        %v865 = vmul.f32 %v845, %v859
        %v866 = vmul.f32 %v846, %v860
        %v867 = vmul.f32 %v815, 399.62518
        %v868 = vmul.f32 %v816, 399.62518
        %v869 = vmul.f32 %v817, 399.62518
        %v870 = vmul.f32 %v818, 399.62518
        %v871 = vmul.f32 %v819, 399.62518
        %v872 = vmul.f32 %v820, 399.62518
        %v873 = vsub.f32 %v861, %v867
        %v874 = vsub.f32 %v862, %v868
        %v875 = vsub.f32 %v863, %v869
        %v876 = vsub.f32 %v864, %v870
        %v877 = vsub.f32 %v865, %v871
        %v878 = vsub.f32 %v866, %v872
        %v879 = vadd.f32 %v809, %v873
        %v880 = vadd.f32 %v810, %v874
        %v881 = vadd.f32 %v811, %v875
        %v882 = vadd.f32 %v812, %v876
        %v883 = vadd.f32 %v813, %v877
        %v884 = vadd.f32 %v814, %v878
        %891 = vrot.lane.b32.xlu0 %v292, 127
        %v892 = vpop.permute.xlu0 %891
        %893 = vrot.lane.b32.xlu0 %v293, 127
        %v894 = vpop.permute.xlu0 %893
        %895 = vrot.lane.b32.xlu0 %v294, 127
        %v896 = vpop.permute.xlu0 %895
        %897 = vrot.lane.b32.xlu0 %v295, 127
        %v898 = vpop.permute.xlu0 %897
        %899 = vrot.lane.b32.xlu0 %v296, 127
        %v900 = vpop.permute.xlu0 %899
        %901 = vrot.lane.b32.xlu0 %v297, 127
        %v902 = vpop.permute.xlu0 %901
        %v909 = vsel %vm197, %v292, %v892
        %v910 = vsel %vm197, %v293, %v894
        %v911 = vsel %vm197, %v294, %v896
        %v912 = vsel %vm197, %v295, %v898
        %v913 = vsel %vm197, %v296, %v900
        %v914 = vsel %vm197, %v297, %v902
        %v915 = vsub.f32 %v175, %v909
        %v916 = vsub.f32 %v176, %v910
        %v917 = vsub.f32 %v177, %v911
        %v918 = vsub.f32 %v178, %v912
        %v919 = vsub.f32 %v179, %v913
        %v920 = vsub.f32 %v180, %v914
        %927 = vrot.lane.b32.xlu0 %v319, 127
        %v928 = vpop.permute.xlu0 %927
        %929 = vrot.lane.b32.xlu0 %v320, 127
        %v930 = vpop.permute.xlu0 %929
        %931 = vrot.lane.b32.xlu0 %v321, 127
        %v932 = vpop.permute.xlu0 %931
        %933 = vrot.lane.b32.xlu0 %v322, 127
        %v934 = vpop.permute.xlu0 %933
        %935 = vrot.lane.b32.xlu0 %v323, 127
        %v936 = vpop.permute.xlu0 %935
        %937 = vrot.lane.b32.xlu0 %v324, 127
        %v938 = vpop.permute.xlu0 %937
        %v945 = vsel %vm197, %v319, %v928
        %v946 = vsel %vm197, %v320, %v930
        %v947 = vsel %vm197, %v321, %v932
        %v948 = vsel %vm197, %v322, %v934
        %v949 = vsel %vm197, %v323, %v936
        %v950 = vsel %vm197, %v324, %v938
        %v951 = vsub.f32 %v181, %v945
        %v952 = vsub.f32 %v182, %v946
        %v953 = vsub.f32 %v183, %v947
        %v954 = vsub.f32 %v184, %v948
        %v955 = vsub.f32 %v185, %v949
        %v956 = vsub.f32 %v186, %v950
        %v957 = vmul.f32 %v915, %v915
        %v958 = vmul.f32 %v916, %v916
        %v959 = vmul.f32 %v917, %v917
        %v960 = vmul.f32 %v918, %v918
        %v961 = vmul.f32 %v919, %v919
        %v962 = vmul.f32 %v920, %v920
        %v963 = vadd.f32 %v957, %v959
        %v964 = vadd.f32 %v963, %v961
        %v965 = vadd.f32 %v958, %v960
        %v966 = vadd.f32 %v965, %v962
        %v967 = vadd.f32 %v964, 1e-09
        %v968 = vadd.f32 %v966, 1e-09
        %v969 = vrsqrt.pop %v967
        %v970 = vrsqrt.pop %v968
        %v971 = vmul.f32 %v915, %v969
        %v972 = vmul.f32 %v916, %v970
        %v973 = vmul.f32 %v917, %v969
        %v974 = vmul.f32 %v918, %v970
        %v975 = vmul.f32 %v919, %v969
        %v976 = vmul.f32 %v920, %v970
        %v977 = vmul.f32 %v951, %v971
        %v978 = vmul.f32 %v952, %v972
        %v979 = vmul.f32 %v953, %v973
        %v980 = vmul.f32 %v954, %v974
        %v981 = vmul.f32 %v955, %v975
        %v982 = vmul.f32 %v956, %v976
        %v983 = vadd.f32 %v977, %v979
        %v984 = vadd.f32 %v983, %v981
        %v985 = vadd.f32 %v978, %v980
        %v986 = vadd.f32 %v985, %v982
        %v987 = vmul.f32 %v984, 0.07317355
        %v988 = vmul.f32 %v986, 0.07317355
        %v989 = vsub.f32 3.1220717, %v987
        %v990 = vsub.f32 3.1220717, %v988
        %v991 = vmul.f32 %v971, %v989
        %v992 = vmul.f32 %v972, %v990
        %v993 = vmul.f32 %v973, %v989
        %v994 = vmul.f32 %v974, %v990
        %v995 = vmul.f32 %v975, %v989
        %v996 = vmul.f32 %v976, %v990
        %v997 = vmul.f32 %v915, 282.57767
        %v998 = vmul.f32 %v916, 282.57767
        %v999 = vmul.f32 %v917, 282.57767
        %v1000 = vmul.f32 %v918, 282.57767
        %v1001 = vmul.f32 %v919, 282.57767
        %v1002 = vmul.f32 %v920, 282.57767
        %v1003 = vsub.f32 %v991, %v997
        %v1004 = vsub.f32 %v992, %v998
        %v1005 = vsub.f32 %v993, %v999
        %v1006 = vsub.f32 %v994, %v1000
        %v1007 = vsub.f32 %v995, %v1001
        %v1008 = vsub.f32 %v996, %v1002
        %v1009 = vadd.f32 %v879, %v1003
        %v1010 = vadd.f32 %v880, %v1004
        %v1011 = vadd.f32 %v881, %v1005
        %v1012 = vadd.f32 %v882, %v1006
        %v1013 = vadd.f32 %v883, %v1007
        %v1014 = vadd.f32 %v884, %v1008
        %1015 = vrot.lane.b32.xlu0 %v175, 127
        %v1016 = vpop.permute.xlu0 %1015
        %1017 = vrot.lane.b32.xlu0 %v176, 127
        %v1018 = vpop.permute.xlu0 %1017
        %1019 = vrot.lane.b32.xlu0 %v177, 127
        %v1020 = vpop.permute.xlu0 %1019
        %1021 = vrot.lane.b32.xlu0 %v178, 127
        %v1022 = vpop.permute.xlu0 %1021
        %1023 = vrot.lane.b32.xlu0 %v179, 127
        %v1024 = vpop.permute.xlu0 %1023
        %1025 = vrot.lane.b32.xlu0 %v180, 127
        %v1026 = vpop.permute.xlu0 %1025
        %v1033 = vsel %vm197, %v175, %v1016
        %v1034 = vsel %vm197, %v176, %v1018
        %v1035 = vsel %vm197, %v177, %v1020
        %v1036 = vsel %vm197, %v178, %v1022
        %v1037 = vsel %vm197, %v179, %v1024
        %v1038 = vsel %vm197, %v180, %v1026
        %v1039 = vsub.f32 %v175, %v1033
        %v1040 = vsub.f32 %v176, %v1034
        %v1041 = vsub.f32 %v177, %v1035
        %v1042 = vsub.f32 %v178, %v1036
        %v1043 = vsub.f32 %v179, %v1037
        %v1044 = vsub.f32 %v180, %v1038
        %1045 = vrot.lane.b32.xlu0 %v181, 127
        %v1046 = vpop.permute.xlu0 %1045
        %1047 = vrot.lane.b32.xlu0 %v182, 127
        %v1048 = vpop.permute.xlu0 %1047
        %1049 = vrot.lane.b32.xlu0 %v183, 127
        %v1050 = vpop.permute.xlu0 %1049
        %1051 = vrot.lane.b32.xlu0 %v184, 127
        %v1052 = vpop.permute.xlu0 %1051
        %1053 = vrot.lane.b32.xlu0 %v185, 127
        %v1054 = vpop.permute.xlu0 %1053
        %1055 = vrot.lane.b32.xlu0 %v186, 127
        %v1056 = vpop.permute.xlu0 %1055
        %v1063 = vsel %vm197, %v181, %v1046
        %v1064 = vsel %vm197, %v182, %v1048
        %v1065 = vsel %vm197, %v183, %v1050
        %v1066 = vsel %vm197, %v184, %v1052
        %v1067 = vsel %vm197, %v185, %v1054
        %v1068 = vsel %vm197, %v186, %v1056
        %v1069 = vsub.f32 %v181, %v1063
        %v1070 = vsub.f32 %v182, %v1064
        %v1071 = vsub.f32 %v183, %v1065
        %v1072 = vsub.f32 %v184, %v1066
        %v1073 = vsub.f32 %v185, %v1067
        %v1074 = vsub.f32 %v186, %v1068
        %v1075 = vmul.f32 %v1039, %v1039
        %v1076 = vmul.f32 %v1040, %v1040
        %v1077 = vmul.f32 %v1041, %v1041
        %v1078 = vmul.f32 %v1042, %v1042
        %v1079 = vmul.f32 %v1043, %v1043
        %v1080 = vmul.f32 %v1044, %v1044
        %v1081 = vadd.f32 %v1075, %v1077
        %v1082 = vadd.f32 %v1081, %v1079
        %v1083 = vadd.f32 %v1076, %v1078
        %v1084 = vadd.f32 %v1083, %v1080
        %v1085 = vadd.f32 %v1082, 1e-09
        %v1086 = vadd.f32 %v1084, 1e-09
        %v1087 = vrsqrt.pop %v1085
        %v1088 = vrsqrt.pop %v1086
        %v1089 = vmul.f32 %v1039, %v1087
        %v1090 = vmul.f32 %v1040, %v1088
        %v1091 = vmul.f32 %v1041, %v1087
        %v1092 = vmul.f32 %v1042, %v1088
        %v1093 = vmul.f32 %v1043, %v1087
        %v1094 = vmul.f32 %v1044, %v1088
        %v1095 = vmul.f32 %v1069, %v1089
        %v1096 = vmul.f32 %v1070, %v1090
        %v1097 = vmul.f32 %v1071, %v1091
        %v1098 = vmul.f32 %v1072, %v1092
        %v1099 = vmul.f32 %v1073, %v1093
        %v1100 = vmul.f32 %v1074, %v1094
        %v1101 = vadd.f32 %v1095, %v1097
        %v1102 = vadd.f32 %v1101, %v1099
        %v1103 = vadd.f32 %v1096, %v1098
        %v1104 = vadd.f32 %v1103, %v1100
        %v1105 = vmul.f32 %v1102, 0.07317355
        %v1106 = vmul.f32 %v1104, 0.07317355
        %v1107 = vsub.f32 3.1220717, %v1105
        %v1108 = vsub.f32 3.1220717, %v1106
        %v1109 = vmul.f32 %v1089, %v1107
        %v1110 = vmul.f32 %v1090, %v1108
        %v1111 = vmul.f32 %v1091, %v1107
        %v1112 = vmul.f32 %v1092, %v1108
        %v1113 = vmul.f32 %v1093, %v1107
        %v1114 = vmul.f32 %v1094, %v1108
        %v1115 = vmul.f32 %v1039, 399.62518
        %v1116 = vmul.f32 %v1040, 399.62518
        %v1117 = vmul.f32 %v1041, 399.62518
        %v1118 = vmul.f32 %v1042, 399.62518
        %v1119 = vmul.f32 %v1043, 399.62518
        %v1120 = vmul.f32 %v1044, 399.62518
        %v1121 = vsub.f32 %v1109, %v1115
        %v1122 = vsub.f32 %v1110, %v1116
        %v1123 = vsub.f32 %v1111, %v1117
        %v1124 = vsub.f32 %v1112, %v1118
        %v1125 = vsub.f32 %v1113, %v1119
        %v1126 = vsub.f32 %v1114, %v1120
        %v1127 = vadd.f32 %v1009, %v1121
        %v1128 = vadd.f32 %v1010, %v1122
        %v1129 = vadd.f32 %v1011, %v1123
        %v1130 = vadd.f32 %v1012, %v1124
        %v1131 = vadd.f32 %v1013, %v1125
        %v1132 = vadd.f32 %v1014, %v1126
        %1139 = vrot.lane.b32.xlu0 %v349, 127
        %v1140 = vpop.permute.xlu0 %1139
        %1141 = vrot.lane.b32.xlu0 %v350, 127
        %v1142 = vpop.permute.xlu0 %1141
        %1143 = vrot.lane.b32.xlu0 %v351, 127
        %v1144 = vpop.permute.xlu0 %1143
        %1145 = vrot.lane.b32.xlu0 %v352, 127
        %v1146 = vpop.permute.xlu0 %1145
        %1147 = vrot.lane.b32.xlu0 %v353, 127
        %v1148 = vpop.permute.xlu0 %1147
        %1149 = vrot.lane.b32.xlu0 %v354, 127
        %v1150 = vpop.permute.xlu0 %1149
        %v1157 = vsel %vm197, %v349, %v1140
        %v1158 = vsel %vm197, %v350, %v1142
        %v1159 = vsel %vm197, %v351, %v1144
        %v1160 = vsel %vm197, %v352, %v1146
        %v1161 = vsel %vm197, %v353, %v1148
        %v1162 = vsel %vm197, %v354, %v1150
        %v1163 = vsub.f32 %v175, %v1157
        %v1164 = vsub.f32 %v176, %v1158
        %v1165 = vsub.f32 %v177, %v1159
        %v1166 = vsub.f32 %v178, %v1160
        %v1167 = vsub.f32 %v179, %v1161
        %v1168 = vsub.f32 %v180, %v1162
        %1175 = vrot.lane.b32.xlu0 %v376, 127
        %v1176 = vpop.permute.xlu0 %1175
        %1177 = vrot.lane.b32.xlu0 %v377, 127
        %v1178 = vpop.permute.xlu0 %1177
        %1179 = vrot.lane.b32.xlu0 %v378, 127
        %v1180 = vpop.permute.xlu0 %1179
        %1181 = vrot.lane.b32.xlu0 %v379, 127
        %v1182 = vpop.permute.xlu0 %1181
        %1183 = vrot.lane.b32.xlu0 %v380, 127
        %v1184 = vpop.permute.xlu0 %1183
        %1185 = vrot.lane.b32.xlu0 %v381, 127
        %v1186 = vpop.permute.xlu0 %1185
        %v1193 = vsel %vm197, %v376, %v1176
        %v1194 = vsel %vm197, %v377, %v1178
        %v1195 = vsel %vm197, %v378, %v1180
        %v1196 = vsel %vm197, %v379, %v1182
        %v1197 = vsel %vm197, %v380, %v1184
        %v1198 = vsel %vm197, %v381, %v1186
        %v1199 = vsub.f32 %v181, %v1193
        %v1200 = vsub.f32 %v182, %v1194
        %v1201 = vsub.f32 %v183, %v1195
        %v1202 = vsub.f32 %v184, %v1196
        %v1203 = vsub.f32 %v185, %v1197
        %v1204 = vsub.f32 %v186, %v1198
        %v1205 = vmul.f32 %v1163, %v1163
        %v1206 = vmul.f32 %v1164, %v1164
        %v1207 = vmul.f32 %v1165, %v1165
        %v1208 = vmul.f32 %v1166, %v1166
        %v1209 = vmul.f32 %v1167, %v1167
        %v1210 = vmul.f32 %v1168, %v1168
        %v1211 = vadd.f32 %v1205, %v1207
        %v1212 = vadd.f32 %v1211, %v1209
        %v1213 = vadd.f32 %v1206, %v1208
        %v1214 = vadd.f32 %v1213, %v1210
        %v1215 = vadd.f32 %v1212, 1e-09
        %v1216 = vadd.f32 %v1214, 1e-09
        %v1217 = vrsqrt.pop %v1215
        %v1218 = vrsqrt.pop %v1216
        %v1219 = vmul.f32 %v1163, %v1217
        %v1220 = vmul.f32 %v1164, %v1218
        %v1221 = vmul.f32 %v1165, %v1217
        %v1222 = vmul.f32 %v1166, %v1218
        %v1223 = vmul.f32 %v1167, %v1217
        %v1224 = vmul.f32 %v1168, %v1218
        %v1225 = vmul.f32 %v1199, %v1219
        %v1226 = vmul.f32 %v1200, %v1220
        %v1227 = vmul.f32 %v1201, %v1221
        %v1228 = vmul.f32 %v1202, %v1222
        %v1229 = vmul.f32 %v1203, %v1223
        %v1230 = vmul.f32 %v1204, %v1224
        %v1231 = vadd.f32 %v1225, %v1227
        %v1232 = vadd.f32 %v1231, %v1229
        %v1233 = vadd.f32 %v1226, %v1228
        %v1234 = vadd.f32 %v1233, %v1230
        %v1235 = vmul.f32 %v1232, 0.07317355
        %v1236 = vmul.f32 %v1234, 0.07317355
        %v1237 = vsub.f32 3.1220717, %v1235
        %v1238 = vsub.f32 3.1220717, %v1236
        %v1239 = vmul.f32 %v1219, %v1237
        %v1240 = vmul.f32 %v1220, %v1238
        %v1241 = vmul.f32 %v1221, %v1237
        %v1242 = vmul.f32 %v1222, %v1238
        %v1243 = vmul.f32 %v1223, %v1237
        %v1244 = vmul.f32 %v1224, %v1238
        %v1245 = vmul.f32 %v1163, 282.57767
        %v1246 = vmul.f32 %v1164, 282.57767
        %v1247 = vmul.f32 %v1165, 282.57767
        %v1248 = vmul.f32 %v1166, 282.57767
        %v1249 = vmul.f32 %v1167, 282.57767
        %v1250 = vmul.f32 %v1168, 282.57767
        %v1251 = vsub.f32 %v1239, %v1245
        %v1252 = vsub.f32 %v1240, %v1246
        %v1253 = vsub.f32 %v1241, %v1247
        %v1254 = vsub.f32 %v1242, %v1248
        %v1255 = vsub.f32 %v1243, %v1249
        %v1256 = vsub.f32 %v1244, %v1250
        %v1257 = vadd.f32 %v1127, %v1251
        %v1258 = vadd.f32 %v1128, %v1252
        %v1259 = vadd.f32 %v1129, %v1253
        %v1260 = vadd.f32 %v1130, %v1254
        %v1261 = vadd.f32 %v1131, %v1255
        %v1262 = vadd.f32 %v1132, %v1256
        %v1263 = vsub.f32 %v175, %v349
        %v1264 = vsub.f32 %v176, %v350
        %v1265 = vsub.f32 %v177, %v351
        %v1266 = vsub.f32 %v178, %v352
        %v1267 = vsub.f32 %v179, %v353
        %v1268 = vsub.f32 %v180, %v354
        %v1269 = vsub.f32 %v181, %v376
        %v1270 = vsub.f32 %v182, %v377
        %v1271 = vsub.f32 %v183, %v378
        %v1272 = vsub.f32 %v184, %v379
        %v1273 = vsub.f32 %v185, %v380
        %v1274 = vsub.f32 %v186, %v381
        %v1275 = vmul.f32 %v1263, %v1263
        %v1276 = vmul.f32 %v1264, %v1264
        %v1277 = vmul.f32 %v1265, %v1265
        %v1278 = vmul.f32 %v1266, %v1266
        %v1279 = vmul.f32 %v1267, %v1267
        %v1280 = vmul.f32 %v1268, %v1268
        %v1281 = vadd.f32 %v1275, %v1277
        %v1282 = vadd.f32 %v1281, %v1279
        %v1283 = vadd.f32 %v1276, %v1278
        %v1284 = vadd.f32 %v1283, %v1280
        %v1285 = vadd.f32 %v1282, 1e-09
        %v1286 = vadd.f32 %v1284, 1e-09
        %v1287 = vrsqrt.pop %v1285
        %v1288 = vrsqrt.pop %v1286
        %v1289 = vmul.f32 %v1263, %v1287
        %v1290 = vmul.f32 %v1264, %v1288
        %v1291 = vmul.f32 %v1265, %v1287
        %v1292 = vmul.f32 %v1266, %v1288
        %v1293 = vmul.f32 %v1267, %v1287
        %v1294 = vmul.f32 %v1268, %v1288
        %v1295 = vmul.f32 %v1269, %v1289
        %v1296 = vmul.f32 %v1270, %v1290
        %v1297 = vmul.f32 %v1271, %v1291
        %v1298 = vmul.f32 %v1272, %v1292
        %v1299 = vmul.f32 %v1273, %v1293
        %v1300 = vmul.f32 %v1274, %v1294
        %v1301 = vadd.f32 %v1295, %v1297
        %v1302 = vadd.f32 %v1301, %v1299
        %v1303 = vadd.f32 %v1296, %v1298
        %v1304 = vadd.f32 %v1303, %v1300
        %v1305 = vmul.f32 %v1302, 0.07317355
        %v1306 = vmul.f32 %v1304, 0.07317355
        %v1307 = vsub.f32 3.1220717, %v1305
        %v1308 = vsub.f32 3.1220717, %v1306
        %v1309 = vmul.f32 %v1289, %v1307
        %v1310 = vmul.f32 %v1290, %v1308
        %v1311 = vmul.f32 %v1291, %v1307
        %v1312 = vmul.f32 %v1292, %v1308
        %v1313 = vmul.f32 %v1293, %v1307
        %v1314 = vmul.f32 %v1294, %v1308
        %v1315 = vmul.f32 %v1263, 399.62518
        %v1316 = vmul.f32 %v1264, 399.62518
        %v1317 = vmul.f32 %v1265, 399.62518
        %v1318 = vmul.f32 %v1266, 399.62518
        %v1319 = vmul.f32 %v1267, 399.62518
        %v1320 = vmul.f32 %v1268, 399.62518
        %v1321 = vsub.f32 %v1309, %v1315
        %v1322 = vsub.f32 %v1310, %v1316
        %v1323 = vsub.f32 %v1311, %v1317
        %v1324 = vsub.f32 %v1312, %v1318
        %v1325 = vsub.f32 %v1313, %v1319
        %v1326 = vsub.f32 %v1314, %v1320
        %v1327 = vadd.f32 %v1257, %v1321
        %v1328 = vadd.f32 %v1258, %v1322
        %v1329 = vadd.f32 %v1259, %v1323
        %v1330 = vadd.f32 %v1260, %v1324
        %v1331 = vadd.f32 %v1261, %v1325
        %v1332 = vadd.f32 %v1262, %v1326
        %1333 = vrot.lane.b32.xlu0 %v349, 1
        %v1334 = vpop.permute.xlu0 %1333
        %1335 = vrot.lane.b32.xlu0 %v350, 1
        %v1336 = vpop.permute.xlu0 %1335
        %1337 = vrot.lane.b32.xlu0 %v351, 1
        %v1338 = vpop.permute.xlu0 %1337
        %1339 = vrot.lane.b32.xlu0 %v352, 1
        %v1340 = vpop.permute.xlu0 %1339
        %1341 = vrot.lane.b32.xlu0 %v353, 1
        %v1342 = vpop.permute.xlu0 %1341
        %1343 = vrot.lane.b32.xlu0 %v354, 1
        %v1344 = vpop.permute.xlu0 %1343
        %v1351 = vsel %vm196, %v349, %v1334
        %v1352 = vsel %vm196, %v350, %v1336
        %v1353 = vsel %vm196, %v351, %v1338
        %v1354 = vsel %vm196, %v352, %v1340
        %v1355 = vsel %vm196, %v353, %v1342
        %v1356 = vsel %vm196, %v354, %v1344
        %v1357 = vsub.f32 %v175, %v1351
        %v1358 = vsub.f32 %v176, %v1352
        %v1359 = vsub.f32 %v177, %v1353
        %v1360 = vsub.f32 %v178, %v1354
        %v1361 = vsub.f32 %v179, %v1355
        %v1362 = vsub.f32 %v180, %v1356
        %1363 = vrot.lane.b32.xlu0 %v376, 1
        %v1364 = vpop.permute.xlu0 %1363
        %1365 = vrot.lane.b32.xlu0 %v377, 1
        %v1366 = vpop.permute.xlu0 %1365
        %1367 = vrot.lane.b32.xlu0 %v378, 1
        %v1368 = vpop.permute.xlu0 %1367
        %1369 = vrot.lane.b32.xlu0 %v379, 1
        %v1370 = vpop.permute.xlu0 %1369
        %1371 = vrot.lane.b32.xlu0 %v380, 1
        %v1372 = vpop.permute.xlu0 %1371
        %1373 = vrot.lane.b32.xlu0 %v381, 1
        %v1374 = vpop.permute.xlu0 %1373
        %v1381 = vsel %vm196, %v376, %v1364
        %v1382 = vsel %vm196, %v377, %v1366
        %v1383 = vsel %vm196, %v378, %v1368
        %v1384 = vsel %vm196, %v379, %v1370
        %v1385 = vsel %vm196, %v380, %v1372
        %v1386 = vsel %vm196, %v381, %v1374
        %v1387 = vsub.f32 %v181, %v1381
        %v1388 = vsub.f32 %v182, %v1382
        %v1389 = vsub.f32 %v183, %v1383
        %v1390 = vsub.f32 %v184, %v1384
        %v1391 = vsub.f32 %v185, %v1385
        %v1392 = vsub.f32 %v186, %v1386
        %v1393 = vmul.f32 %v1357, %v1357
        %v1394 = vmul.f32 %v1358, %v1358
        %v1395 = vmul.f32 %v1359, %v1359
        %v1396 = vmul.f32 %v1360, %v1360
        %v1397 = vmul.f32 %v1361, %v1361
        %v1398 = vmul.f32 %v1362, %v1362
        %v1399 = vadd.f32 %v1393, %v1395
        %v1400 = vadd.f32 %v1399, %v1397
        %v1401 = vadd.f32 %v1394, %v1396
        %v1402 = vadd.f32 %v1401, %v1398
        %v1403 = vadd.f32 %v1400, 1e-09
        %v1404 = vadd.f32 %v1402, 1e-09
        %v1405 = vrsqrt.pop %v1403
        %v1406 = vrsqrt.pop %v1404
        %v1407 = vmul.f32 %v1357, %v1405
        %v1408 = vmul.f32 %v1358, %v1406
        %v1409 = vmul.f32 %v1359, %v1405
        %v1410 = vmul.f32 %v1360, %v1406
        %v1411 = vmul.f32 %v1361, %v1405
        %v1412 = vmul.f32 %v1362, %v1406
        %v1413 = vmul.f32 %v1387, %v1407
        %v1414 = vmul.f32 %v1388, %v1408
        %v1415 = vmul.f32 %v1389, %v1409
        %v1416 = vmul.f32 %v1390, %v1410
        %v1417 = vmul.f32 %v1391, %v1411
        %v1418 = vmul.f32 %v1392, %v1412
        %v1419 = vadd.f32 %v1413, %v1415
        %v1420 = vadd.f32 %v1419, %v1417
        %v1421 = vadd.f32 %v1414, %v1416
        %v1422 = vadd.f32 %v1421, %v1418
        %v1423 = vmul.f32 %v1420, 0.07317355
        %v1424 = vmul.f32 %v1422, 0.07317355
        %v1425 = vsub.f32 3.1220717, %v1423
        %v1426 = vsub.f32 3.1220717, %v1424
        %v1427 = vmul.f32 %v1407, %v1425
        %v1428 = vmul.f32 %v1408, %v1426
        %v1429 = vmul.f32 %v1409, %v1425
        %v1430 = vmul.f32 %v1410, %v1426
        %v1431 = vmul.f32 %v1411, %v1425
        %v1432 = vmul.f32 %v1412, %v1426
        %v1433 = vmul.f32 %v1357, 282.57767
        %v1434 = vmul.f32 %v1358, 282.57767
        %v1435 = vmul.f32 %v1359, 282.57767
        %v1436 = vmul.f32 %v1360, 282.57767
        %v1437 = vmul.f32 %v1361, 282.57767
        %v1438 = vmul.f32 %v1362, 282.57767
        %v1439 = vsub.f32 %v1427, %v1433
        %v1440 = vsub.f32 %v1428, %v1434
        %v1441 = vsub.f32 %v1429, %v1435
        %v1442 = vsub.f32 %v1430, %v1436
        %v1443 = vsub.f32 %v1431, %v1437
        %v1444 = vsub.f32 %v1432, %v1438
        %v1445 = vadd.f32 %v1327, %v1439
        %v1446 = vadd.f32 %v1328, %v1440
        %v1447 = vadd.f32 %v1329, %v1441
        %v1448 = vadd.f32 %v1330, %v1442
        %v1449 = vadd.f32 %v1331, %v1443
        %v1450 = vadd.f32 %v1332, %v1444
        %1451 = vrot.lane.b32.xlu0 %v175, 1
        %v1452 = vpop.permute.xlu0 %1451
        %1453 = vrot.lane.b32.xlu0 %v176, 1
        %v1454 = vpop.permute.xlu0 %1453
        %1455 = vrot.lane.b32.xlu0 %v177, 1
        %v1456 = vpop.permute.xlu0 %1455
        %1457 = vrot.lane.b32.xlu0 %v178, 1
        %v1458 = vpop.permute.xlu0 %1457
        %1459 = vrot.lane.b32.xlu0 %v179, 1
        %v1460 = vpop.permute.xlu0 %1459
        %1461 = vrot.lane.b32.xlu0 %v180, 1
        %v1462 = vpop.permute.xlu0 %1461
        %v1469 = vsel %vm196, %v175, %v1452
        %v1470 = vsel %vm196, %v176, %v1454
        %v1471 = vsel %vm196, %v177, %v1456
        %v1472 = vsel %vm196, %v178, %v1458
        %v1473 = vsel %vm196, %v179, %v1460
        %v1474 = vsel %vm196, %v180, %v1462
        %v1475 = vsub.f32 %v175, %v1469
        %v1476 = vsub.f32 %v176, %v1470
        %v1477 = vsub.f32 %v177, %v1471
        %v1478 = vsub.f32 %v178, %v1472
        %v1479 = vsub.f32 %v179, %v1473
        %v1480 = vsub.f32 %v180, %v1474
        %1481 = vrot.lane.b32.xlu0 %v181, 1
        %v1482 = vpop.permute.xlu0 %1481
        %1483 = vrot.lane.b32.xlu0 %v182, 1
        %v1484 = vpop.permute.xlu0 %1483
        %1485 = vrot.lane.b32.xlu0 %v183, 1
        %v1486 = vpop.permute.xlu0 %1485
        %1487 = vrot.lane.b32.xlu0 %v184, 1
        %v1488 = vpop.permute.xlu0 %1487
        %1489 = vrot.lane.b32.xlu0 %v185, 1
        %v1490 = vpop.permute.xlu0 %1489
        %1491 = vrot.lane.b32.xlu0 %v186, 1
        %v1492 = vpop.permute.xlu0 %1491
        %v1499 = vsel %vm196, %v181, %v1482
        %v1500 = vsel %vm196, %v182, %v1484
        %v1501 = vsel %vm196, %v183, %v1486
        %v1502 = vsel %vm196, %v184, %v1488
        %v1503 = vsel %vm196, %v185, %v1490
        %v1504 = vsel %vm196, %v186, %v1492
        %v1505 = vsub.f32 %v181, %v1499
        %v1506 = vsub.f32 %v182, %v1500
        %v1507 = vsub.f32 %v183, %v1501
        %v1508 = vsub.f32 %v184, %v1502
        %v1509 = vsub.f32 %v185, %v1503
        %v1510 = vsub.f32 %v186, %v1504
        %v1511 = vmul.f32 %v1475, %v1475
        %v1512 = vmul.f32 %v1476, %v1476
        %v1513 = vmul.f32 %v1477, %v1477
        %v1514 = vmul.f32 %v1478, %v1478
        %v1515 = vmul.f32 %v1479, %v1479
        %v1516 = vmul.f32 %v1480, %v1480
        %v1517 = vadd.f32 %v1511, %v1513
        %v1518 = vadd.f32 %v1517, %v1515
        %v1519 = vadd.f32 %v1512, %v1514
        %v1520 = vadd.f32 %v1519, %v1516
        %v1521 = vadd.f32 %v1518, 1e-09
        %v1522 = vadd.f32 %v1520, 1e-09
        %v1523 = vrsqrt.pop %v1521
        %v1524 = vrsqrt.pop %v1522
        %v1525 = vmul.f32 %v1475, %v1523
        %v1526 = vmul.f32 %v1476, %v1524
        %v1527 = vmul.f32 %v1477, %v1523
        %v1528 = vmul.f32 %v1478, %v1524
        %v1529 = vmul.f32 %v1479, %v1523
        %v1530 = vmul.f32 %v1480, %v1524
        %v1531 = vmul.f32 %v1505, %v1525
        %v1532 = vmul.f32 %v1506, %v1526
        %v1533 = vmul.f32 %v1507, %v1527
        %v1534 = vmul.f32 %v1508, %v1528
        %v1535 = vmul.f32 %v1509, %v1529
        %v1536 = vmul.f32 %v1510, %v1530
        %v1537 = vadd.f32 %v1531, %v1533
        %v1538 = vadd.f32 %v1537, %v1535
        %v1539 = vadd.f32 %v1532, %v1534
        %v1540 = vadd.f32 %v1539, %v1536
        %v1541 = vmul.f32 %v1538, 0.07317355
        %v1542 = vmul.f32 %v1540, 0.07317355
        %v1543 = vsub.f32 3.1220717, %v1541
        %v1544 = vsub.f32 3.1220717, %v1542
        %v1545 = vmul.f32 %v1525, %v1543
        %v1546 = vmul.f32 %v1526, %v1544
        %v1547 = vmul.f32 %v1527, %v1543
        %v1548 = vmul.f32 %v1528, %v1544
        %v1549 = vmul.f32 %v1529, %v1543
        %v1550 = vmul.f32 %v1530, %v1544
        %v1551 = vmul.f32 %v1475, 399.62518
        %v1552 = vmul.f32 %v1476, 399.62518
        %v1553 = vmul.f32 %v1477, 399.62518
        %v1554 = vmul.f32 %v1478, 399.62518
        %v1555 = vmul.f32 %v1479, 399.62518
        %v1556 = vmul.f32 %v1480, 399.62518
        %v1557 = vsub.f32 %v1545, %v1551
        %v1558 = vsub.f32 %v1546, %v1552
        %v1559 = vsub.f32 %v1547, %v1553
        %v1560 = vsub.f32 %v1548, %v1554
        %v1561 = vsub.f32 %v1549, %v1555
        %v1562 = vsub.f32 %v1550, %v1556
        %v1563 = vadd.f32 %v1445, %v1557
        %v1564 = vadd.f32 %v1446, %v1558
        %v1565 = vadd.f32 %v1447, %v1559
        %v1566 = vadd.f32 %v1448, %v1560
        %v1567 = vadd.f32 %v1449, %v1561
        %v1568 = vadd.f32 %v1450, %v1562
        %1569 = vrot.lane.b32.xlu0 %v292, 1
        %v1570 = vpop.permute.xlu0 %1569
        %1571 = vrot.lane.b32.xlu0 %v293, 1
        %v1572 = vpop.permute.xlu0 %1571
        %1573 = vrot.lane.b32.xlu0 %v294, 1
        %v1574 = vpop.permute.xlu0 %1573
        %1575 = vrot.lane.b32.xlu0 %v295, 1
        %v1576 = vpop.permute.xlu0 %1575
        %1577 = vrot.lane.b32.xlu0 %v296, 1
        %v1578 = vpop.permute.xlu0 %1577
        %1579 = vrot.lane.b32.xlu0 %v297, 1
        %v1580 = vpop.permute.xlu0 %1579
        %v1587 = vsel %vm196, %v292, %v1570
        %v1588 = vsel %vm196, %v293, %v1572
        %v1589 = vsel %vm196, %v294, %v1574
        %v1590 = vsel %vm196, %v295, %v1576
        %v1591 = vsel %vm196, %v296, %v1578
        %v1592 = vsel %vm196, %v297, %v1580
        %v1593 = vsub.f32 %v175, %v1587
        %v1594 = vsub.f32 %v176, %v1588
        %v1595 = vsub.f32 %v177, %v1589
        %v1596 = vsub.f32 %v178, %v1590
        %v1597 = vsub.f32 %v179, %v1591
        %v1598 = vsub.f32 %v180, %v1592
        %1599 = vrot.lane.b32.xlu0 %v319, 1
        %v1600 = vpop.permute.xlu0 %1599
        %1601 = vrot.lane.b32.xlu0 %v320, 1
        %v1602 = vpop.permute.xlu0 %1601
        %1603 = vrot.lane.b32.xlu0 %v321, 1
        %v1604 = vpop.permute.xlu0 %1603
        %1605 = vrot.lane.b32.xlu0 %v322, 1
        %v1606 = vpop.permute.xlu0 %1605
        %1607 = vrot.lane.b32.xlu0 %v323, 1
        %v1608 = vpop.permute.xlu0 %1607
        %1609 = vrot.lane.b32.xlu0 %v324, 1
        %v1610 = vpop.permute.xlu0 %1609
        %v1617 = vsel %vm196, %v319, %v1600
        %v1618 = vsel %vm196, %v320, %v1602
        %v1619 = vsel %vm196, %v321, %v1604
        %v1620 = vsel %vm196, %v322, %v1606
        %v1621 = vsel %vm196, %v323, %v1608
        %v1622 = vsel %vm196, %v324, %v1610
        %v1623 = vsub.f32 %v181, %v1617
        %v1624 = vsub.f32 %v182, %v1618
        %v1625 = vsub.f32 %v183, %v1619
        %v1626 = vsub.f32 %v184, %v1620
        %v1627 = vsub.f32 %v185, %v1621
        %v1628 = vsub.f32 %v186, %v1622
        %v1629 = vmul.f32 %v1593, %v1593
        %v1630 = vmul.f32 %v1594, %v1594
        %v1631 = vmul.f32 %v1595, %v1595
        %v1632 = vmul.f32 %v1596, %v1596
        %v1633 = vmul.f32 %v1597, %v1597
        %v1634 = vmul.f32 %v1598, %v1598
        %v1635 = vadd.f32 %v1629, %v1631
        %v1636 = vadd.f32 %v1635, %v1633
        %v1637 = vadd.f32 %v1630, %v1632
        %v1638 = vadd.f32 %v1637, %v1634
        %v1639 = vadd.f32 %v1636, 1e-09
        %v1640 = vadd.f32 %v1638, 1e-09
        %v1641 = vrsqrt.pop %v1639
        %v1642 = vrsqrt.pop %v1640
        %v1643 = vmul.f32 %v1593, %v1641
        %v1644 = vmul.f32 %v1594, %v1642
        %v1645 = vmul.f32 %v1595, %v1641
        %v1646 = vmul.f32 %v1596, %v1642
        %v1647 = vmul.f32 %v1597, %v1641
        %v1648 = vmul.f32 %v1598, %v1642
        %v1649 = vmul.f32 %v1623, %v1643
        %v1650 = vmul.f32 %v1624, %v1644
        %v1651 = vmul.f32 %v1625, %v1645
        %v1652 = vmul.f32 %v1626, %v1646
        %v1653 = vmul.f32 %v1627, %v1647
        %v1654 = vmul.f32 %v1628, %v1648
        %v1655 = vadd.f32 %v1649, %v1651
        %v1656 = vadd.f32 %v1655, %v1653
        %v1657 = vadd.f32 %v1650, %v1652
        %v1658 = vadd.f32 %v1657, %v1654
        %v1659 = vmul.f32 %v1656, 0.07317355
        %v1660 = vmul.f32 %v1658, 0.07317355
        %v1661 = vsub.f32 3.1220717, %v1659
        %v1662 = vsub.f32 3.1220717, %v1660
        %v1663 = vmul.f32 %v1643, %v1661
        %v1664 = vmul.f32 %v1644, %v1662
        %v1665 = vmul.f32 %v1645, %v1661
        %v1666 = vmul.f32 %v1646, %v1662
        %v1667 = vmul.f32 %v1647, %v1661
        %v1668 = vmul.f32 %v1648, %v1662
        %v1669 = vmul.f32 %v1593, 282.57767
        %v1670 = vmul.f32 %v1594, 282.57767
        %v1671 = vmul.f32 %v1595, 282.57767
        %v1672 = vmul.f32 %v1596, 282.57767
        %v1673 = vmul.f32 %v1597, 282.57767
        %v1674 = vmul.f32 %v1598, 282.57767
        %v1675 = vsub.f32 %v1663, %v1669
        %v1676 = vsub.f32 %v1664, %v1670
        %v1677 = vsub.f32 %v1665, %v1671
        %v1678 = vsub.f32 %v1666, %v1672
        %v1679 = vsub.f32 %v1667, %v1673
        %v1680 = vsub.f32 %v1668, %v1674
        %v1681 = vadd.f32 %v1563, %v1675
        %v1682 = vadd.f32 %v1564, %v1676
        %v1683 = vadd.f32 %v1565, %v1677
        %v1684 = vadd.f32 %v1566, %v1678
        %v1685 = vadd.f32 %v1567, %v1679
        %v1686 = vadd.f32 %v1568, %v1680
        %1687 = vst [vmem:[%s171] sm:$0xff] %v1681
        %1688 = vst [vmem:[%s171 + $0x8] sm:$0xff] %v1682
        %v1689 = vadd.f32 %v1683, -0.0030596303
        %v1690 = vadd.f32 %v1684, -0.0030596303
        %s1691 = scalar_lea.vmem %s171, 16 [#allocation5]
        %1692 = vst [vmem:[%s1691] sm:$0xff] %v1689
        %1693 = vst [vmem:[%s1691 + $0x8] sm:$0xff] %v1690
        %s1694 = scalar_lea.vmem %s171, 32 [#allocation5]
        %1695 = vst [vmem:[%s1694] sm:$0xff] %v1685
        %1696 = vst [vmem:[%s1694 + $0x8] sm:$0xff] %v1686
        %s1697 = sand.u32 %s79, 1
        %s1698 = scalar_lea.sflag [#allocation4], %s1697
        %s1699 = sand.u32 %s79, 1
        %s1700 = smul.addr %s1699, 48
        %s1701 = scalar_lea.vmem [#allocation5], %s1700
        // Predicated region
        $region33: #{tpu_custom_call.1} parent=27 // pred_check
          %p1702 = pneg %p89
        $region34: #{tpu_custom_call.1} parent=27 // pred_check_branch
          %1704 = sbr.rel (%p1702) target = $region36
        $region35: #{tpu_custom_call.1} parent=27 // pred_region
          %s1706 = ssub.s32 768, 768
          %1707 = vsyncadd %s1698, %s1706
          %s1708 = smul.addr %s19, 128
          %s1709 = scalar_lea.hbm %s2, %s1708
          %s1710 = sshll.u32 %s1701, 4
          %s1711 = int_to_ptr.vmem [resolvable:$true] %s1710
          %1716 = dma.vmem_to_hbm [thread:$0]  %s1711, 768, %s1709, %s1698, 128, 256, 8
        $region36: #{tpu_custom_call.1} parent=27 // pred_fallthru
          _
      $region28: #{tpu_custom_call.1} parent=5 // pred_fallthru
        _
      %p1717 = scmp.le.s32.totalorder 2, %s14
      // Predicated region
      $region37: #{tpu_custom_call.1} parent=5 // pred_check
        %p1718 = pneg %p1717
      $region38: #{tpu_custom_call.1} parent=5 // pred_check_branch
        %1720 = sbr.rel (%p1718) target = $region40
      $region39: #{tpu_custom_call.1} parent=5 // pred_region
        %s1721 = ssub.s32 %s14, 2
        // Predicated region
        $region41: #{tpu_custom_call.1} parent=39 // pred_check
          %p1722 = pneg %p95
        $region42: #{tpu_custom_call.1} parent=39 // pred_check_branch
          %1724 = sbr.rel (%p1722) target = $region44
        $region43: #{tpu_custom_call.1} parent=39 // pred_region
          %s1725 = sand.u32 %s80, 1
          %s1726 = scalar_lea.sflag [#allocation4], %s1725
          %s1727 = sand.u32 %s80, 1
          %s1728 = smul.addr %s1727, 48
          %s1729 = scalar_lea.vmem [#allocation5], %s1728
          %1730 = dma.done %s1726, 768
        $region44: #{tpu_custom_call.1} parent=39 // pred_fallthru
          _
      $region40: #{tpu_custom_call.1} parent=5 // pred_fallthru
        _
    $region6: #{tpu_custom_call.1} parent=1 // loop_footer
      %s18 = sadd.s32 1, %s14
    $region7: #{tpu_custom_call.1} parent=1 // loop_footer_branch
      %13 = sbr.rel target = $region3
    $region8: #{tpu_custom_call.1} parent=1 // loop_exit
      _
    %1731 = vsyncpa [#allocation3], 1
    %s1732 = scalar_lea.sflag [#allocation3], 1
    %1733 = vsyncpa %s1732, 1
    %1734 = vsyncpa [#allocation4], 1
    %s1735 = scalar_lea.sflag [#allocation4], 1
    %1736 = vsyncpa %s1735, 1

</llo_original>
